<compile_context>
chip_gen: v6e
topology: v6e:2x2x1
jax: 0.10.0
libtpu: 0.0.40
codegen_flags: <defaults>
</compile_context>

<pallas_src>
import functools

import jax
import jax.numpy as jnp
import numpy as np
from jax import lax
from jax.experimental import pallas as pl
from jax.experimental.pallas import tpu as pltpu

LANE = 128
SUBLANE = 8


def _round_up(x, m):
    return ((x + m - 1) // m) * m


# ---------------------------------------------------------------------------
# Fused Pallas kernel:
#   in-kernel embedding+input-projection gather -> LSTM recurrence -> Linear
# Grid iterates sequentially over time chunks; h/c live in VMEM scratch.
# ---------------------------------------------------------------------------
def _fused_lstm_kernel(tok_ref, gemb_ref, whh_ref, wp_ref, bp_ref,
                       enc_ref, pred_ref, h_scr, c_scr, *, n_vocab):
    """One grid step == one chunk of Tc time steps (rows are time-major: t*B+b).

    tok_ref : (Tc*B, 1)   int32 token ids for this chunk
    gemb_ref: (Vr, 4H)    fused table G = embed_w @ W_ih^T + (b_ih+b_hh)
                          (rows zero-padded to a sublane multiple)
    whh_ref : (H, 4H)     hidden->gates weights (pre-transposed, PyTorch i,f,g,o)
    wp_ref  : (H, Vp)     prediction weights, vocab zero-padded to 128 lanes
    bp_ref  : (1, Vp)
    enc_ref : (Tc*B, H)   output: hidden states
    pred_ref: (Tc*B, Vp)  output: logits (lane-dense padded vocab)
    h_scr/c_scr : (B, H)  recurrent state, persists across chunks
    """
    @pl.when(pl.program_id(0) == 0)
    def _():
        h_scr[...] = jnp.zeros_like(h_scr)
        c_scr[...] = jnp.zeros_like(c_scr)

    B, H = h_scr.shape
    rows = tok_ref.shape[0]
    Tc = rows // B

    # (1) Fused embedding + input projection for the whole chunk:
    #     embedded @ W_ih^T + b == onehot(tok) @ (embed_w @ W_ih^T + b) == G[tok].
    #     The gather of G rows is done exactly on the VPU (select-accumulate),
    #     so no HBM `embedded` intermediate and no precision ambiguity.
    tok = tok_ref[...]                                        # (rows, 1) int32
    gx = jnp.zeros((rows, 4 * H), jnp.float32)
    for v in range(n_vocab):
        sel = (tok == v).astype(jnp.float32)                  # (rows, 1)
        gx = gx + sel * gemb_ref[v:v + 1, :]                  # (rows, 4H)
    # TODO(synk): for a large vocab, replace this O(V) select loop with a
    # one-hot MXU matmul or a scalar-prefetched DMA row gather from HBM.

    # (2) Sequential recurrence: only the small h_prev @ W_hh matmul remains on
    #     the serial critical path.  Tc is static -> fully unrolled
    #     straight-line code; no per-step grid bookkeeping.
    whh = whh_ref[...]
    h = h_scr[...]
    c = c_scr[...]
    for t in range(Tc):
        g = gx[t * B:(t + 1) * B, :] + jnp.dot(
            h, whh, preferred_element_type=jnp.float32)       # (B, 4H)
        i_g = jax.nn.sigmoid(g[:, 0 * H:1 * H])
        f_g = jax.nn.sigmoid(g[:, 1 * H:2 * H])
        g_g = jnp.tanh(g[:, 2 * H:3 * H])
        o_g = jax.nn.sigmoid(g[:, 3 * H:4 * H])
        c = f_g * c + i_g * g_g
        h = o_g * jnp.tanh(c)
        enc_ref[t * B:(t + 1) * B, :] = h.astype(enc_ref.dtype)
    h_scr[...] = h
    c_scr[...] = c

    # (3) Fused, batched output projection for the whole chunk.  Vp is a
    #     multiple of 128 -> unmasked lane-dense stores; no second pallas_call
    #     and no `encoded` HBM round trip before the projection.
    hs = enc_ref[...]                                         # (Tc*B, H)
    pred_ref[...] = (
        jnp.dot(hs, wp_ref[...], preferred_element_type=jnp.float32)
        + bp_ref[...]
    ).astype(pred_ref.dtype)


def lstm_pred_fused_pallas(tok2d, gate_embed, w_hh_t, w_pred_pad, b_pred_pad,
                           *, batch, n_vocab, t_chunk=None):
    """tok2d: (T*B, 1) int32 time-major token ids.

    Returns (encoded2d (T*B, H), preds2d (T*B, Vp))."""
    N = tok2d.shape[0]
    B = batch
    T = N // B
    H = w_hh_t.shape[0]
    Vr = gate_embed.shape[0]
    Vp = w_pred_pad.shape[1]
    if t_chunk is None:
        t_chunk = T                       # small T: one grid step for everything
    assert T % t_chunk == 0
    rows = t_chunk * B
    n_chunks = T // t_chunk

    kernel = functools.partial(_fused_lstm_kernel, n_vocab=n_vocab)

    # NOTE(perf, large-model): at real H, cast weights to bf16 on v6e/v7x, mark
    # the constant weight blocks pipeline_mode=pl.Buffered(1) (or one-time
    # manual DMA) to halve their VMEM footprint on v7x (64 MiB), and split B
    # over a "parallel" grid axis to use v7x's second TensorCore.  Not needed
    # at these toy shapes; kept f32 to match the reference.
    return pl.pallas_call(
        kernel,
        out_shape=(jax.ShapeDtypeStruct((N, H), jnp.float32),
                   jax.ShapeDtypeStruct((N, Vp), jnp.float32)),
        grid_spec=pltpu.PrefetchScalarGridSpec(
            num_scalar_prefetch=0,
            grid=(n_chunks,),
            in_specs=[
                pl.BlockSpec((rows, 1), lambda i: (i, 0)),
                pl.BlockSpec((Vr, 4 * H), lambda i: (0, 0)),
                pl.BlockSpec((H, 4 * H), lambda i: (0, 0)),
                pl.BlockSpec((H, Vp), lambda i: (0, 0)),
                pl.BlockSpec((1, Vp), lambda i: (0, 0)),
            ],
            out_specs=[
                pl.BlockSpec((rows, H), lambda i: (i, 0)),
                pl.BlockSpec((rows, Vp), lambda i: (i, 0)),
            ],
            scratch_shapes=[
                pltpu.VMEM((B, H), jnp.float32),   # h state
                pltpu.VMEM((B, H), jnp.float32),   # c state
            ],
        ),
        compiler_params=pltpu.CompilerParams(
            dimension_semantics=("arbitrary",),    # sequential recurrence over chunks
        ),
    )(tok2d, gate_embed, w_hh_t, w_pred_pad, b_pred_pad)


# ---------------------------------------------------------------------------
# SequenceModel (lstm flavor) in JAX, entire hot path in one Pallas kernel
# ---------------------------------------------------------------------------
class SequenceModelPallas:
    def __init__(self, n_states, n_symbols, n_embed, n_hidden, key):
        n_symbols = int(n_symbols)
        self.n_states = n_states
        self.n_symbols = n_symbols
        self.n_vocab = n_symbols + 3
        self.n_vocab_pad = _round_up(self.n_vocab, LANE)
        self.n_embed = n_embed
        self.n_hidden = n_hidden
        self.sos = n_symbols
        self.eos = n_symbols + 1
        self.pad = n_symbols + 2

        k = jax.random.split(key, 7)
        H, E, V, Vp = n_hidden, n_embed, self.n_vocab, self.n_vocab_pad
        bound = 1.0 / np.sqrt(H)
        # nn.Embedding: N(0,1) init
        self.embed_w = jax.random.normal(k[0], (V, E), jnp.float32)
        # nn.LSTM params (uniform(-1/sqrt(H), 1/sqrt(H))), stored pre-transposed
        self.w_ih_t = jax.random.uniform(k[1], (E, 4 * H), jnp.float32, -bound, bound)
        self.w_hh_t = jax.random.uniform(k[2], (H, 4 * H), jnp.float32, -bound, bound)
        b_ih = jax.random.uniform(k[3], (4 * H,), jnp.float32, -bound, bound)
        b_hh = jax.random.uniform(k[4], (4 * H,), jnp.float32, -bound, bound)
        self.b_lstm = (b_ih + b_hh).reshape(1, 4 * H)
        # nn.Linear(n_hidden, n_vocab): weight + bias, uniform(-1/sqrt(H), 1/sqrt(H))
        self.pred_w_t = jax.random.uniform(k[5], (H, V), jnp.float32, -bound, bound)
        self.pred_b = jax.random.uniform(k[6], (V,), jnp.float32, -bound, bound)

        # --- kernel-side folded / padded parameter copies (done once) ---
        # Fused gate-embedding table: embedded@W_ih^T + b == G[token].
        Vr = _round_up(V, SUBLANE)
        g_tbl = self.embed_w @ self.w_ih_t + self.b_lstm          # (V, 4H)
        self.gate_embed = jnp.zeros((Vr, 4 * H), jnp.float32).at[:V, :].set(g_tbl)
        # lane-dense padded prediction weights (zero pad -> sliced off in forward)
        self.pred_w_t_pad = jnp.zeros((H, Vp), jnp.float32).at[:, :V].set(self.pred_w_t)
        self.pred_b_pad = jnp.zeros((1, Vp), jnp.float32).at[0, :V].set(self.pred_b)

    @functools.partial(jax.jit, static_argnums=0)
    def forward(self, seqs):
        # seqs: (T, B) int32 token ids (eval mode: dropouts are identity)
        T, B = seqs.shape
        tok2d = seqs.astype(jnp.int32).reshape(T * B, 1)        # time-major rows
        enc2d, pred2d_pad = lstm_pred_fused_pallas(
            tok2d, self.gate_embed, self.w_hh_t,
            self.pred_w_t_pad, self.pred_b_pad,
            batch=B, n_vocab=self.n_vocab)
        encoded = enc2d.reshape(T, B, self.n_hidden)
        preds = pred2d_pad[:, :self.n_vocab].reshape(T, B, self.n_vocab)
        return preds, encoded


# ---------------------------------------------------------------------------
# Pure-JAX reference (unfused, mirrors the PyTorch module op-for-op)
# ---------------------------------------------------------------------------
def _reference_forward(model, seqs):
    T, B = seqs.shape
    H = model.n_hidden
    x = model.embed_w[seqs]

    def step(carry, xt):
        h, c = carry
        gates = xt @ model.w_ih_t + h @ model.w_hh_t + model.b_lstm
        i = jax.nn.sigmoid(gates[:, 0 * H:1 * H])
        f = jax.nn.sigmoid(gates[:, 1 * H:2 * H])
        g = jnp.tanh(gates[:, 2 * H:3 * H])
        o = jax.nn.sigmoid(gates[:, 3 * H:4 * H])
        c = f * c + i * g
        h = o * jnp.tanh(c)
        return (h, c), h

    h0 = jnp.zeros((B, H), jnp.float32)
    _, hs = lax.scan(step, (h0, h0), x)
    preds = hs.reshape(T * B, H) @ model.pred_w_t + model.pred_b
    return preds.reshape(T, B, model.n_vocab), hs


if __name__ == "__main__":
    key = jax.random.PRNGKey(0)
    k_param, k_data = jax.random.split(key)

    n_states, n_symbols = 4, 5          # -> n_vocab = 8 (padded to 128 in-kernel)
    n_embed, n_hidden = 32, 32
    T, B = 8, 8

    model = SequenceModelPallas(n_states, n_symbols, n_embed, n_hidden, k_param)

    # deterministic example batch: sos followed by random symbols
    body = jax.random.randint(k_data, (T - 1, B), 0, n_symbols, dtype=jnp.int32)
    seqs = jnp.concatenate(
        [jnp.full((1, B), model.sos, dtype=jnp.int32), body], axis=0
    )  # (T, B)

    preds, encoded = model.forward(seqs)
    jax.block_until_ready((preds, encoded))

    ref_preds, ref_encoded = _reference_forward(model, seqs)
    np.testing.assert_allclose(np.asarray(encoded), np.asarray(ref_encoded),
                               rtol=1e-5, atol=2e-5)
    np.testing.assert_allclose(np.asarray(preds), np.asarray(ref_preds),
                               rtol=1e-5, atol=2e-5)

    print("KERNEL_OK")
</pallas_src>

<mosaic_0001>
module attributes {stable_mosaic.version = 11 : i64} {
  func.func @_fused_lstm_kernel(%arg0: i32, %arg1: memref<64x1xi32, #tpu.memory_space<vmem>>, %arg2: memref<8x128xf32, #tpu.memory_space<vmem>>, %arg3: memref<32x128xf32, #tpu.memory_space<vmem>>, %arg4: memref<32x128xf32, #tpu.memory_space<vmem>>, %arg5: memref<1x128xf32, #tpu.memory_space<vmem>>, %arg6: memref<64x32xf32, #tpu.memory_space<vmem>>, %arg7: memref<64x128xf32, #tpu.memory_space<vmem>>, %arg8: memref<8x32xf32, #tpu.memory_space<vmem>>, %arg9: memref<8x32xf32, #tpu.memory_space<vmem>>) attributes {dimension_semantics = [#tpu.dimension_semantics<arbitrary>], iteration_bounds = array<i64: 1>, scalar_prefetch = 0 : i64, scratch_operands = 2 : i64, tpu.core_type = #tpu.core_type<tc>, window_params = [{transform_indices = @transform_0, window_bounds = array<i64: 64, 1>}, {pipeline_mode = #tpu.pipeline_mode<synchronous>, transform_indices = @transform_1, window_bounds = array<i64: 8, 128>}, {pipeline_mode = #tpu.pipeline_mode<synchronous>, transform_indices = @transform_2, window_bounds = array<i64: 32, 128>}, {pipeline_mode = #tpu.pipeline_mode<synchronous>, transform_indices = @transform_3, window_bounds = array<i64: 32, 128>}, {pipeline_mode = #tpu.pipeline_mode<synchronous>, transform_indices = @transform_4, window_bounds = array<i64: 1, 128>}, {transform_indices = @transform_5, window_bounds = array<i64: 64, 32>}, {transform_indices = @transform_6, window_bounds = array<i64: 64, 128>}]} {
    %c0_i32 = arith.constant 0 : i32
    %0 = arith.cmpi eq, %arg0, %c0_i32 : i32
    %1 = arith.extui %0 : i1 to i32
    %c0_i32_0 = arith.constant 0 : i32
    %2 = arith.cmpi ne, %1, %c0_i32_0 : i32
    scf.if %2 {
      %cst_72 = arith.constant 0.000000e+00 : f32
      %321 = vector.broadcast %cst_72 : f32 to vector<8x32xf32>
      %c0_73 = arith.constant 0 : index
      %c0_74 = arith.constant 0 : index
      %322 = vector.load %arg8[%c0_73, %c0_74] : memref<8x32xf32, #tpu.memory_space<vmem>>, vector<8x32xf32>
      tpu.vector_store %arg8[%c0_73, %c0_74], %321 {strides = array<i32>} : memref<8x32xf32, #tpu.memory_space<vmem>>, vector<8x32xf32>,
      %cst_75 = arith.constant 0.000000e+00 : f32
      %323 = vector.broadcast %cst_75 : f32 to vector<8x32xf32>
      %c0_76 = arith.constant 0 : index
      %c0_77 = arith.constant 0 : index
      %324 = vector.load %arg9[%c0_76, %c0_77] : memref<8x32xf32, #tpu.memory_space<vmem>>, vector<8x32xf32>
      tpu.vector_store %arg9[%c0_76, %c0_77], %323 {strides = array<i32>} : memref<8x32xf32, #tpu.memory_space<vmem>>, vector<8x32xf32>,
    } else {
    }
    %c0 = arith.constant 0 : index
    %c0_1 = arith.constant 0 : index
    %3 = vector.load %arg1[%c0, %c0_1] : memref<64x1xi32, #tpu.memory_space<vmem>>, vector<64x1xi32>
    %cst = arith.constant 0.000000e+00 : f32
    %4 = vector.broadcast %cst : f32 to vector<64x128xf32>
    %c0_i32_2 = arith.constant 0 : i32
    %5 = vector.broadcast %c0_i32_2 : i32 to vector<64x1xi32>
    %6 = arith.cmpi eq, %3, %5 : vector<64x1xi32>
    %7 = arith.extui %6 : vector<64x1xi1> to vector<64x1xi32>
    %8 = arith.sitofp %7 : vector<64x1xi32> to vector<64x1xf32>
    %c0_3 = arith.constant 0 : index
    %c0_4 = arith.constant 0 : index
    %9 = vector.load %arg2[%c0_3, %c0_4] : memref<8x128xf32, #tpu.memory_space<vmem>>, vector<1x128xf32>
    %10 = vector.broadcast %8 : vector<64x1xf32> to vector<64x128xf32>
    %11 = vector.broadcast %9 : vector<1x128xf32> to vector<64x128xf32>
    %12 = arith.mulf %10, %11 : vector<64x128xf32>
    %13 = arith.addf %4, %12 : vector<64x128xf32>
    %c1_i32 = arith.constant 1 : i32
    %14 = vector.broadcast %c1_i32 : i32 to vector<64x1xi32>
    %15 = arith.cmpi eq, %3, %14 : vector<64x1xi32>
    %16 = arith.extui %15 : vector<64x1xi1> to vector<64x1xi32>
    %17 = arith.sitofp %16 : vector<64x1xi32> to vector<64x1xf32>
    %c1 = arith.constant 1 : index
    %c0_5 = arith.constant 0 : index
    %18 = vector.load %arg2[%c1, %c0_5] : memref<8x128xf32, #tpu.memory_space<vmem>>, vector<1x128xf32>
    %19 = vector.broadcast %17 : vector<64x1xf32> to vector<64x128xf32>
    %20 = vector.broadcast %18 : vector<1x128xf32> to vector<64x128xf32>
    %21 = arith.mulf %19, %20 : vector<64x128xf32>
    %22 = arith.addf %13, %21 : vector<64x128xf32>
    %c2_i32 = arith.constant 2 : i32
    %23 = vector.broadcast %c2_i32 : i32 to vector<64x1xi32>
    %24 = arith.cmpi eq, %3, %23 : vector<64x1xi32>
    %25 = arith.extui %24 : vector<64x1xi1> to vector<64x1xi32>
    %26 = arith.sitofp %25 : vector<64x1xi32> to vector<64x1xf32>
    %c2 = arith.constant 2 : index
    %c0_6 = arith.constant 0 : index
    %27 = vector.load %arg2[%c2, %c0_6] : memref<8x128xf32, #tpu.memory_space<vmem>>, vector<1x128xf32>
    %28 = vector.broadcast %26 : vector<64x1xf32> to vector<64x128xf32>
    %29 = vector.broadcast %27 : vector<1x128xf32> to vector<64x128xf32>
    %30 = arith.mulf %28, %29 : vector<64x128xf32>
    %31 = arith.addf %22, %30 : vector<64x128xf32>
    %c3_i32 = arith.constant 3 : i32
    %32 = vector.broadcast %c3_i32 : i32 to vector<64x1xi32>
    %33 = arith.cmpi eq, %3, %32 : vector<64x1xi32>
    %34 = arith.extui %33 : vector<64x1xi1> to vector<64x1xi32>
    %35 = arith.sitofp %34 : vector<64x1xi32> to vector<64x1xf32>
    %c3 = arith.constant 3 : index
    %c0_7 = arith.constant 0 : index
    %36 = vector.load %arg2[%c3, %c0_7] : memref<8x128xf32, #tpu.memory_space<vmem>>, vector<1x128xf32>
    %37 = vector.broadcast %35 : vector<64x1xf32> to vector<64x128xf32>
    %38 = vector.broadcast %36 : vector<1x128xf32> to vector<64x128xf32>
    %39 = arith.mulf %37, %38 : vector<64x128xf32>
    %40 = arith.addf %31, %39 : vector<64x128xf32>
    %c4_i32 = arith.constant 4 : i32
    %41 = vector.broadcast %c4_i32 : i32 to vector<64x1xi32>
    %42 = arith.cmpi eq, %3, %41 : vector<64x1xi32>
    %43 = arith.extui %42 : vector<64x1xi1> to vector<64x1xi32>
    %44 = arith.sitofp %43 : vector<64x1xi32> to vector<64x1xf32>
    %c4 = arith.constant 4 : index
    %c0_8 = arith.constant 0 : index
    %45 = vector.load %arg2[%c4, %c0_8] : memref<8x128xf32, #tpu.memory_space<vmem>>, vector<1x128xf32>
    %46 = vector.broadcast %44 : vector<64x1xf32> to vector<64x128xf32>
    %47 = vector.broadcast %45 : vector<1x128xf32> to vector<64x128xf32>
    %48 = arith.mulf %46, %47 : vector<64x128xf32>
    %49 = arith.addf %40, %48 : vector<64x128xf32>
    %c5_i32 = arith.constant 5 : i32
    %50 = vector.broadcast %c5_i32 : i32 to vector<64x1xi32>
    %51 = arith.cmpi eq, %3, %50 : vector<64x1xi32>
    %52 = arith.extui %51 : vector<64x1xi1> to vector<64x1xi32>
    %53 = arith.sitofp %52 : vector<64x1xi32> to vector<64x1xf32>
    %c5 = arith.constant 5 : index
    %c0_9 = arith.constant 0 : index
    %54 = vector.load %arg2[%c5, %c0_9] : memref<8x128xf32, #tpu.memory_space<vmem>>, vector<1x128xf32>
    %55 = vector.broadcast %53 : vector<64x1xf32> to vector<64x128xf32>
    %56 = vector.broadcast %54 : vector<1x128xf32> to vector<64x128xf32>
    %57 = arith.mulf %55, %56 : vector<64x128xf32>
    %58 = arith.addf %49, %57 : vector<64x128xf32>
    %c6_i32 = arith.constant 6 : i32
    %59 = vector.broadcast %c6_i32 : i32 to vector<64x1xi32>
    %60 = arith.cmpi eq, %3, %59 : vector<64x1xi32>
    %61 = arith.extui %60 : vector<64x1xi1> to vector<64x1xi32>
    %62 = arith.sitofp %61 : vector<64x1xi32> to vector<64x1xf32>
    %c6 = arith.constant 6 : index
    %c0_10 = arith.constant 0 : index
    %63 = vector.load %arg2[%c6, %c0_10] : memref<8x128xf32, #tpu.memory_space<vmem>>, vector<1x128xf32>
    %64 = vector.broadcast %62 : vector<64x1xf32> to vector<64x128xf32>
    %65 = vector.broadcast %63 : vector<1x128xf32> to vector<64x128xf32>
    %66 = arith.mulf %64, %65 : vector<64x128xf32>
    %67 = arith.addf %58, %66 : vector<64x128xf32>
    %c7_i32 = arith.constant 7 : i32
    %68 = vector.broadcast %c7_i32 : i32 to vector<64x1xi32>
    %69 = arith.cmpi eq, %3, %68 : vector<64x1xi32>
    %70 = arith.extui %69 : vector<64x1xi1> to vector<64x1xi32>
    %71 = arith.sitofp %70 : vector<64x1xi32> to vector<64x1xf32>
    %c7 = arith.constant 7 : index
    %c0_11 = arith.constant 0 : index
    %72 = vector.load %arg2[%c7, %c0_11] : memref<8x128xf32, #tpu.memory_space<vmem>>, vector<1x128xf32>
    %73 = vector.broadcast %71 : vector<64x1xf32> to vector<64x128xf32>
    %74 = vector.broadcast %72 : vector<1x128xf32> to vector<64x128xf32>
    %75 = arith.mulf %73, %74 : vector<64x128xf32>
    %76 = arith.addf %67, %75 : vector<64x128xf32>
    %c0_12 = arith.constant 0 : index
    %c0_13 = arith.constant 0 : index
    %77 = vector.load %arg3[%c0_12, %c0_13] : memref<32x128xf32, #tpu.memory_space<vmem>>, vector<32x128xf32>
    %c0_14 = arith.constant 0 : index
    %c0_15 = arith.constant 0 : index
    %78 = vector.load %arg8[%c0_14, %c0_15] : memref<8x32xf32, #tpu.memory_space<vmem>>, vector<8x32xf32>
    %c0_16 = arith.constant 0 : index
    %c0_17 = arith.constant 0 : index
    %79 = vector.load %arg9[%c0_16, %c0_17] : memref<8x32xf32, #tpu.memory_space<vmem>>, vector<8x32xf32>
    %80 = vector.extract_strided_slice %76 {offsets = [0, 0], sizes = [8, 128], strides = [1, 1]} : vector<64x128xf32> to vector<8x128xf32>
    %cst_18 = arith.constant dense<0.000000e+00> : vector<8x128xf32>
    %81 = tpu.matmul %78, %77, %cst_18 {dimension_numbers = #tpu.dot_dimension_numbers<[1], [0], [0], [1], [0, 0, 1, 1], [], []>} : vector<8x32xf32>, vector<32x128xf32>, vector<8x128xf32> -> vector<8x128xf32>
    %82 = arith.addf %80, %81 : vector<8x128xf32>
    %83 = vector.extract_strided_slice %82 {offsets = [0, 0], sizes = [8, 32], strides = [1, 1]} : vector<8x128xf32> to vector<8x32xf32>
    %84 = arith.negf %83 : vector<8x32xf32>
    %85 = math.exp %84 : vector<8x32xf32>
    %cst_19 = arith.constant 1.000000e+00 : f32
    %86 = vector.broadcast %cst_19 : f32 to vector<8x32xf32>
    %87 = arith.addf %86, %85 : vector<8x32xf32>
    %88 = arith.divf %86, %87 : vector<8x32xf32>
    %89 = vector.extract_strided_slice %82 {offsets = [0, 32], sizes = [8, 32], strides = [1, 1]} : vector<8x128xf32> to vector<8x32xf32>
    %90 = arith.negf %89 : vector<8x32xf32>
    %91 = math.exp %90 : vector<8x32xf32>
    %cst_20 = arith.constant 1.000000e+00 : f32
    %92 = vector.broadcast %cst_20 : f32 to vector<8x32xf32>
    %93 = arith.addf %92, %91 : vector<8x32xf32>
    %94 = arith.divf %92, %93 : vector<8x32xf32>
    %95 = vector.extract_strided_slice %82 {offsets = [0, 64], sizes = [8, 32], strides = [1, 1]} : vector<8x128xf32> to vector<8x32xf32>
    %96 = math.tanh %95 : vector<8x32xf32>
    %97 = vector.extract_strided_slice %82 {offsets = [0, 96], sizes = [8, 32], strides = [1, 1]} : vector<8x128xf32> to vector<8x32xf32>
    %98 = arith.negf %97 : vector<8x32xf32>
    %99 = math.exp %98 : vector<8x32xf32>
    %cst_21 = arith.constant 1.000000e+00 : f32
    %100 = vector.broadcast %cst_21 : f32 to vector<8x32xf32>
    %101 = arith.addf %100, %99 : vector<8x32xf32>
    %102 = arith.divf %100, %101 : vector<8x32xf32>
    %103 = arith.mulf %94, %79 : vector<8x32xf32>
    %104 = arith.mulf %88, %96 : vector<8x32xf32>
    %105 = arith.addf %103, %104 : vector<8x32xf32>
    %106 = math.tanh %105 : vector<8x32xf32>
    %107 = arith.mulf %102, %106 : vector<8x32xf32>
    %c0_22 = arith.constant 0 : index
    %c0_23 = arith.constant 0 : index
    %108 = vector.load %arg6[%c0_22, %c0_23] : memref<64x32xf32, #tpu.memory_space<vmem>>, vector<8x32xf32>
    tpu.vector_store %arg6[%c0_22, %c0_23], %107 {strides = array<i32>} : memref<64x32xf32, #tpu.memory_space<vmem>>, vector<8x32xf32>,
    %109 = vector.extract_strided_slice %76 {offsets = [8, 0], sizes = [8, 128], strides = [1, 1]} : vector<64x128xf32> to vector<8x128xf32>
    %cst_24 = arith.constant dense<0.000000e+00> : vector<8x128xf32>
    %110 = tpu.matmul %107, %77, %cst_24 {dimension_numbers = #tpu.dot_dimension_numbers<[1], [0], [0], [1], [0, 0, 1, 1], [], []>} : vector<8x32xf32>, vector<32x128xf32>, vector<8x128xf32> -> vector<8x128xf32>
    %111 = arith.addf %109, %110 : vector<8x128xf32>
    %112 = vector.extract_strided_slice %111 {offsets = [0, 0], sizes = [8, 32], strides = [1, 1]} : vector<8x128xf32> to vector<8x32xf32>
    %113 = arith.negf %112 : vector<8x32xf32>
    %114 = math.exp %113 : vector<8x32xf32>
    %cst_25 = arith.constant 1.000000e+00 : f32
    %115 = vector.broadcast %cst_25 : f32 to vector<8x32xf32>
    %116 = arith.addf %115, %114 : vector<8x32xf32>
    %117 = arith.divf %115, %116 : vector<8x32xf32>
    %118 = vector.extract_strided_slice %111 {offsets = [0, 32], sizes = [8, 32], strides = [1, 1]} : vector<8x128xf32> to vector<8x32xf32>
    %119 = arith.negf %118 : vector<8x32xf32>
    %120 = math.exp %119 : vector<8x32xf32>
    %cst_26 = arith.constant 1.000000e+00 : f32
    %121 = vector.broadcast %cst_26 : f32 to vector<8x32xf32>
    %122 = arith.addf %121, %120 : vector<8x32xf32>
    %123 = arith.divf %121, %122 : vector<8x32xf32>
    %124 = vector.extract_strided_slice %111 {offsets = [0, 64], sizes = [8, 32], strides = [1, 1]} : vector<8x128xf32> to vector<8x32xf32>
    %125 = math.tanh %124 : vector<8x32xf32>
    %126 = vector.extract_strided_slice %111 {offsets = [0, 96], sizes = [8, 32], strides = [1, 1]} : vector<8x128xf32> to vector<8x32xf32>
    %127 = arith.negf %126 : vector<8x32xf32>
    %128 = math.exp %127 : vector<8x32xf32>
    %cst_27 = arith.constant 1.000000e+00 : f32
    %129 = vector.broadcast %cst_27 : f32 to vector<8x32xf32>
    %130 = arith.addf %129, %128 : vector<8x32xf32>
    %131 = arith.divf %129, %130 : vector<8x32xf32>
    %132 = arith.mulf %123, %105 : vector<8x32xf32>
    %133 = arith.mulf %117, %125 : vector<8x32xf32>
    %134 = arith.addf %132, %133 : vector<8x32xf32>
    %135 = math.tanh %134 : vector<8x32xf32>
    %136 = arith.mulf %131, %135 : vector<8x32xf32>
    %c8 = arith.constant 8 : index
    %c0_28 = arith.constant 0 : index
    %137 = vector.load %arg6[%c8, %c0_28] : memref<64x32xf32, #tpu.memory_space<vmem>>, vector<8x32xf32>
    tpu.vector_store %arg6[%c8, %c0_28], %136 {strides = array<i32>} : memref<64x32xf32, #tpu.memory_space<vmem>>, vector<8x32xf32>,
    %138 = vector.extract_strided_slice %76 {offsets = [16, 0], sizes = [8, 128], strides = [1, 1]} : vector<64x128xf32> to vector<8x128xf32>
    %cst_29 = arith.constant dense<0.000000e+00> : vector<8x128xf32>
    %139 = tpu.matmul %136, %77, %cst_29 {dimension_numbers = #tpu.dot_dimension_numbers<[1], [0], [0], [1], [0, 0, 1, 1], [], []>} : vector<8x32xf32>, vector<32x128xf32>, vector<8x128xf32> -> vector<8x128xf32>
    %140 = arith.addf %138, %139 : vector<8x128xf32>
    %141 = vector.extract_strided_slice %140 {offsets = [0, 0], sizes = [8, 32], strides = [1, 1]} : vector<8x128xf32> to vector<8x32xf32>
    %142 = arith.negf %141 : vector<8x32xf32>
    %143 = math.exp %142 : vector<8x32xf32>
    %cst_30 = arith.constant 1.000000e+00 : f32
    %144 = vector.broadcast %cst_30 : f32 to vector<8x32xf32>
    %145 = arith.addf %144, %143 : vector<8x32xf32>
    %146 = arith.divf %144, %145 : vector<8x32xf32>
    %147 = vector.extract_strided_slice %140 {offsets = [0, 32], sizes = [8, 32], strides = [1, 1]} : vector<8x128xf32> to vector<8x32xf32>
    %148 = arith.negf %147 : vector<8x32xf32>
    %149 = math.exp %148 : vector<8x32xf32>
    %cst_31 = arith.constant 1.000000e+00 : f32
    %150 = vector.broadcast %cst_31 : f32 to vector<8x32xf32>
    %151 = arith.addf %150, %149 : vector<8x32xf32>
    %152 = arith.divf %150, %151 : vector<8x32xf32>
    %153 = vector.extract_strided_slice %140 {offsets = [0, 64], sizes = [8, 32], strides = [1, 1]} : vector<8x128xf32> to vector<8x32xf32>
    %154 = math.tanh %153 : vector<8x32xf32>
    %155 = vector.extract_strided_slice %140 {offsets = [0, 96], sizes = [8, 32], strides = [1, 1]} : vector<8x128xf32> to vector<8x32xf32>
    %156 = arith.negf %155 : vector<8x32xf32>
    %157 = math.exp %156 : vector<8x32xf32>
    %cst_32 = arith.constant 1.000000e+00 : f32
    %158 = vector.broadcast %cst_32 : f32 to vector<8x32xf32>
    %159 = arith.addf %158, %157 : vector<8x32xf32>
    %160 = arith.divf %158, %159 : vector<8x32xf32>
    %161 = arith.mulf %152, %134 : vector<8x32xf32>
    %162 = arith.mulf %146, %154 : vector<8x32xf32>
    %163 = arith.addf %161, %162 : vector<8x32xf32>
    %164 = math.tanh %163 : vector<8x32xf32>
    %165 = arith.mulf %160, %164 : vector<8x32xf32>
    %c16 = arith.constant 16 : index
    %c0_33 = arith.constant 0 : index
    %166 = vector.load %arg6[%c16, %c0_33] : memref<64x32xf32, #tpu.memory_space<vmem>>, vector<8x32xf32>
    tpu.vector_store %arg6[%c16, %c0_33], %165 {strides = array<i32>} : memref<64x32xf32, #tpu.memory_space<vmem>>, vector<8x32xf32>,
    %167 = vector.extract_strided_slice %76 {offsets = [24, 0], sizes = [8, 128], strides = [1, 1]} : vector<64x128xf32> to vector<8x128xf32>
    %cst_34 = arith.constant dense<0.000000e+00> : vector<8x128xf32>
    %168 = tpu.matmul %165, %77, %cst_34 {dimension_numbers = #tpu.dot_dimension_numbers<[1], [0], [0], [1], [0, 0, 1, 1], [], []>} : vector<8x32xf32>, vector<32x128xf32>, vector<8x128xf32> -> vector<8x128xf32>
    %169 = arith.addf %167, %168 : vector<8x128xf32>
    %170 = vector.extract_strided_slice %169 {offsets = [0, 0], sizes = [8, 32], strides = [1, 1]} : vector<8x128xf32> to vector<8x32xf32>
    %171 = arith.negf %170 : vector<8x32xf32>
    %172 = math.exp %171 : vector<8x32xf32>
    %cst_35 = arith.constant 1.000000e+00 : f32
    %173 = vector.broadcast %cst_35 : f32 to vector<8x32xf32>
    %174 = arith.addf %173, %172 : vector<8x32xf32>
    %175 = arith.divf %173, %174 : vector<8x32xf32>
    %176 = vector.extract_strided_slice %169 {offsets = [0, 32], sizes = [8, 32], strides = [1, 1]} : vector<8x128xf32> to vector<8x32xf32>
    %177 = arith.negf %176 : vector<8x32xf32>
    %178 = math.exp %177 : vector<8x32xf32>
    %cst_36 = arith.constant 1.000000e+00 : f32
    %179 = vector.broadcast %cst_36 : f32 to vector<8x32xf32>
    %180 = arith.addf %179, %178 : vector<8x32xf32>
    %181 = arith.divf %179, %180 : vector<8x32xf32>
    %182 = vector.extract_strided_slice %169 {offsets = [0, 64], sizes = [8, 32], strides = [1, 1]} : vector<8x128xf32> to vector<8x32xf32>
    %183 = math.tanh %182 : vector<8x32xf32>
    %184 = vector.extract_strided_slice %169 {offsets = [0, 96], sizes = [8, 32], strides = [1, 1]} : vector<8x128xf32> to vector<8x32xf32>
    %185 = arith.negf %184 : vector<8x32xf32>
    %186 = math.exp %185 : vector<8x32xf32>
    %cst_37 = arith.constant 1.000000e+00 : f32
    %187 = vector.broadcast %cst_37 : f32 to vector<8x32xf32>
    %188 = arith.addf %187, %186 : vector<8x32xf32>
    %189 = arith.divf %187, %188 : vector<8x32xf32>
    %190 = arith.mulf %181, %163 : vector<8x32xf32>
    %191 = arith.mulf %175, %183 : vector<8x32xf32>
    %192 = arith.addf %190, %191 : vector<8x32xf32>
    %193 = math.tanh %192 : vector<8x32xf32>
    %194 = arith.mulf %189, %193 : vector<8x32xf32>
    %c24 = arith.constant 24 : index
    %c0_38 = arith.constant 0 : index
    %195 = vector.load %arg6[%c24, %c0_38] : memref<64x32xf32, #tpu.memory_space<vmem>>, vector<8x32xf32>
    tpu.vector_store %arg6[%c24, %c0_38], %194 {strides = array<i32>} : memref<64x32xf32, #tpu.memory_space<vmem>>, vector<8x32xf32>,
    %196 = vector.extract_strided_slice %76 {offsets = [32, 0], sizes = [8, 128], strides = [1, 1]} : vector<64x128xf32> to vector<8x128xf32>
    %cst_39 = arith.constant dense<0.000000e+00> : vector<8x128xf32>
    %197 = tpu.matmul %194, %77, %cst_39 {dimension_numbers = #tpu.dot_dimension_numbers<[1], [0], [0], [1], [0, 0, 1, 1], [], []>} : vector<8x32xf32>, vector<32x128xf32>, vector<8x128xf32> -> vector<8x128xf32>
    %198 = arith.addf %196, %197 : vector<8x128xf32>
    %199 = vector.extract_strided_slice %198 {offsets = [0, 0], sizes = [8, 32], strides = [1, 1]} : vector<8x128xf32> to vector<8x32xf32>
    %200 = arith.negf %199 : vector<8x32xf32>
    %201 = math.exp %200 : vector<8x32xf32>
    %cst_40 = arith.constant 1.000000e+00 : f32
    %202 = vector.broadcast %cst_40 : f32 to vector<8x32xf32>
    %203 = arith.addf %202, %201 : vector<8x32xf32>
    %204 = arith.divf %202, %203 : vector<8x32xf32>
    %205 = vector.extract_strided_slice %198 {offsets = [0, 32], sizes = [8, 32], strides = [1, 1]} : vector<8x128xf32> to vector<8x32xf32>
    %206 = arith.negf %205 : vector<8x32xf32>
    %207 = math.exp %206 : vector<8x32xf32>
    %cst_41 = arith.constant 1.000000e+00 : f32
    %208 = vector.broadcast %cst_41 : f32 to vector<8x32xf32>
    %209 = arith.addf %208, %207 : vector<8x32xf32>
    %210 = arith.divf %208, %209 : vector<8x32xf32>
    %211 = vector.extract_strided_slice %198 {offsets = [0, 64], sizes = [8, 32], strides = [1, 1]} : vector<8x128xf32> to vector<8x32xf32>
    %212 = math.tanh %211 : vector<8x32xf32>
    %213 = vector.extract_strided_slice %198 {offsets = [0, 96], sizes = [8, 32], strides = [1, 1]} : vector<8x128xf32> to vector<8x32xf32>
    %214 = arith.negf %213 : vector<8x32xf32>
    %215 = math.exp %214 : vector<8x32xf32>
    %cst_42 = arith.constant 1.000000e+00 : f32
    %216 = vector.broadcast %cst_42 : f32 to vector<8x32xf32>
    %217 = arith.addf %216, %215 : vector<8x32xf32>
    %218 = arith.divf %216, %217 : vector<8x32xf32>
    %219 = arith.mulf %210, %192 : vector<8x32xf32>
    %220 = arith.mulf %204, %212 : vector<8x32xf32>
    %221 = arith.addf %219, %220 : vector<8x32xf32>
    %222 = math.tanh %221 : vector<8x32xf32>
    %223 = arith.mulf %218, %222 : vector<8x32xf32>
    %c32 = arith.constant 32 : index
    %c0_43 = arith.constant 0 : index
    %224 = vector.load %arg6[%c32, %c0_43] : memref<64x32xf32, #tpu.memory_space<vmem>>, vector<8x32xf32>
    tpu.vector_store %arg6[%c32, %c0_43], %223 {strides = array<i32>} : memref<64x32xf32, #tpu.memory_space<vmem>>, vector<8x32xf32>,
    %225 = vector.extract_strided_slice %76 {offsets = [40, 0], sizes = [8, 128], strides = [1, 1]} : vector<64x128xf32> to vector<8x128xf32>
    %cst_44 = arith.constant dense<0.000000e+00> : vector<8x128xf32>
    %226 = tpu.matmul %223, %77, %cst_44 {dimension_numbers = #tpu.dot_dimension_numbers<[1], [0], [0], [1], [0, 0, 1, 1], [], []>} : vector<8x32xf32>, vector<32x128xf32>, vector<8x128xf32> -> vector<8x128xf32>
    %227 = arith.addf %225, %226 : vector<8x128xf32>
    %228 = vector.extract_strided_slice %227 {offsets = [0, 0], sizes = [8, 32], strides = [1, 1]} : vector<8x128xf32> to vector<8x32xf32>
    %229 = arith.negf %228 : vector<8x32xf32>
    %230 = math.exp %229 : vector<8x32xf32>
    %cst_45 = arith.constant 1.000000e+00 : f32
    %231 = vector.broadcast %cst_45 : f32 to vector<8x32xf32>
    %232 = arith.addf %231, %230 : vector<8x32xf32>
    %233 = arith.divf %231, %232 : vector<8x32xf32>
    %234 = vector.extract_strided_slice %227 {offsets = [0, 32], sizes = [8, 32], strides = [1, 1]} : vector<8x128xf32> to vector<8x32xf32>
    %235 = arith.negf %234 : vector<8x32xf32>
    %236 = math.exp %235 : vector<8x32xf32>
    %cst_46 = arith.constant 1.000000e+00 : f32
    %237 = vector.broadcast %cst_46 : f32 to vector<8x32xf32>
    %238 = arith.addf %237, %236 : vector<8x32xf32>
    %239 = arith.divf %237, %238 : vector<8x32xf32>
    %240 = vector.extract_strided_slice %227 {offsets = [0, 64], sizes = [8, 32], strides = [1, 1]} : vector<8x128xf32> to vector<8x32xf32>
    %241 = math.tanh %240 : vector<8x32xf32>
    %242 = vector.extract_strided_slice %227 {offsets = [0, 96], sizes = [8, 32], strides = [1, 1]} : vector<8x128xf32> to vector<8x32xf32>
    %243 = arith.negf %242 : vector<8x32xf32>
    %244 = math.exp %243 : vector<8x32xf32>
    %cst_47 = arith.constant 1.000000e+00 : f32
    %245 = vector.broadcast %cst_47 : f32 to vector<8x32xf32>
    %246 = arith.addf %245, %244 : vector<8x32xf32>
    %247 = arith.divf %245, %246 : vector<8x32xf32>
    %248 = arith.mulf %239, %221 : vector<8x32xf32>
    %249 = arith.mulf %233, %241 : vector<8x32xf32>
    %250 = arith.addf %248, %249 : vector<8x32xf32>
    %251 = math.tanh %250 : vector<8x32xf32>
    %252 = arith.mulf %247, %251 : vector<8x32xf32>
    %c40 = arith.constant 40 : index
    %c0_48 = arith.constant 0 : index
    %253 = vector.load %arg6[%c40, %c0_48] : memref<64x32xf32, #tpu.memory_space<vmem>>, vector<8x32xf32>
    tpu.vector_store %arg6[%c40, %c0_48], %252 {strides = array<i32>} : memref<64x32xf32, #tpu.memory_space<vmem>>, vector<8x32xf32>,
    %254 = vector.extract_strided_slice %76 {offsets = [48, 0], sizes = [8, 128], strides = [1, 1]} : vector<64x128xf32> to vector<8x128xf32>
    %cst_49 = arith.constant dense<0.000000e+00> : vector<8x128xf32>
    %255 = tpu.matmul %252, %77, %cst_49 {dimension_numbers = #tpu.dot_dimension_numbers<[1], [0], [0], [1], [0, 0, 1, 1], [], []>} : vector<8x32xf32>, vector<32x128xf32>, vector<8x128xf32> -> vector<8x128xf32>
    %256 = arith.addf %254, %255 : vector<8x128xf32>
    %257 = vector.extract_strided_slice %256 {offsets = [0, 0], sizes = [8, 32], strides = [1, 1]} : vector<8x128xf32> to vector<8x32xf32>
    %258 = arith.negf %257 : vector<8x32xf32>
    %259 = math.exp %258 : vector<8x32xf32>
    %cst_50 = arith.constant 1.000000e+00 : f32
    %260 = vector.broadcast %cst_50 : f32 to vector<8x32xf32>
    %261 = arith.addf %260, %259 : vector<8x32xf32>
    %262 = arith.divf %260, %261 : vector<8x32xf32>
    %263 = vector.extract_strided_slice %256 {offsets = [0, 32], sizes = [8, 32], strides = [1, 1]} : vector<8x128xf32> to vector<8x32xf32>
    %264 = arith.negf %263 : vector<8x32xf32>
    %265 = math.exp %264 : vector<8x32xf32>
    %cst_51 = arith.constant 1.000000e+00 : f32
    %266 = vector.broadcast %cst_51 : f32 to vector<8x32xf32>
    %267 = arith.addf %266, %265 : vector<8x32xf32>
    %268 = arith.divf %266, %267 : vector<8x32xf32>
    %269 = vector.extract_strided_slice %256 {offsets = [0, 64], sizes = [8, 32], strides = [1, 1]} : vector<8x128xf32> to vector<8x32xf32>
    %270 = math.tanh %269 : vector<8x32xf32>
    %271 = vector.extract_strided_slice %256 {offsets = [0, 96], sizes = [8, 32], strides = [1, 1]} : vector<8x128xf32> to vector<8x32xf32>
    %272 = arith.negf %271 : vector<8x32xf32>
    %273 = math.exp %272 : vector<8x32xf32>
    %cst_52 = arith.constant 1.000000e+00 : f32
    %274 = vector.broadcast %cst_52 : f32 to vector<8x32xf32>
    %275 = arith.addf %274, %273 : vector<8x32xf32>
    %276 = arith.divf %274, %275 : vector<8x32xf32>
    %277 = arith.mulf %268, %250 : vector<8x32xf32>
    %278 = arith.mulf %262, %270 : vector<8x32xf32>
    %279 = arith.addf %277, %278 : vector<8x32xf32>
    %280 = math.tanh %279 : vector<8x32xf32>
    %281 = arith.mulf %276, %280 : vector<8x32xf32>
    %c48 = arith.constant 48 : index
    %c0_53 = arith.constant 0 : index
    %282 = vector.load %arg6[%c48, %c0_53] : memref<64x32xf32, #tpu.memory_space<vmem>>, vector<8x32xf32>
    tpu.vector_store %arg6[%c48, %c0_53], %281 {strides = array<i32>} : memref<64x32xf32, #tpu.memory_space<vmem>>, vector<8x32xf32>,
    %283 = vector.extract_strided_slice %76 {offsets = [56, 0], sizes = [8, 128], strides = [1, 1]} : vector<64x128xf32> to vector<8x128xf32>
    %cst_54 = arith.constant dense<0.000000e+00> : vector<8x128xf32>
    %284 = tpu.matmul %281, %77, %cst_54 {dimension_numbers = #tpu.dot_dimension_numbers<[1], [0], [0], [1], [0, 0, 1, 1], [], []>} : vector<8x32xf32>, vector<32x128xf32>, vector<8x128xf32> -> vector<8x128xf32>
    %285 = arith.addf %283, %284 : vector<8x128xf32>
    %286 = vector.extract_strided_slice %285 {offsets = [0, 0], sizes = [8, 32], strides = [1, 1]} : vector<8x128xf32> to vector<8x32xf32>
    %287 = arith.negf %286 : vector<8x32xf32>
    %288 = math.exp %287 : vector<8x32xf32>
    %cst_55 = arith.constant 1.000000e+00 : f32
    %289 = vector.broadcast %cst_55 : f32 to vector<8x32xf32>
    %290 = arith.addf %289, %288 : vector<8x32xf32>
    %291 = arith.divf %289, %290 : vector<8x32xf32>
    %292 = vector.extract_strided_slice %285 {offsets = [0, 32], sizes = [8, 32], strides = [1, 1]} : vector<8x128xf32> to vector<8x32xf32>
    %293 = arith.negf %292 : vector<8x32xf32>
    %294 = math.exp %293 : vector<8x32xf32>
    %cst_56 = arith.constant 1.000000e+00 : f32
    %295 = vector.broadcast %cst_56 : f32 to vector<8x32xf32>
    %296 = arith.addf %295, %294 : vector<8x32xf32>
    %297 = arith.divf %295, %296 : vector<8x32xf32>
    %298 = vector.extract_strided_slice %285 {offsets = [0, 64], sizes = [8, 32], strides = [1, 1]} : vector<8x128xf32> to vector<8x32xf32>
    %299 = math.tanh %298 : vector<8x32xf32>
    %300 = vector.extract_strided_slice %285 {offsets = [0, 96], sizes = [8, 32], strides = [1, 1]} : vector<8x128xf32> to vector<8x32xf32>
    %301 = arith.negf %300 : vector<8x32xf32>
    %302 = math.exp %301 : vector<8x32xf32>
    %cst_57 = arith.constant 1.000000e+00 : f32
    %303 = vector.broadcast %cst_57 : f32 to vector<8x32xf32>
    %304 = arith.addf %303, %302 : vector<8x32xf32>
    %305 = arith.divf %303, %304 : vector<8x32xf32>
    %306 = arith.mulf %297, %279 : vector<8x32xf32>
    %307 = arith.mulf %291, %299 : vector<8x32xf32>
    %308 = arith.addf %306, %307 : vector<8x32xf32>
    %309 = math.tanh %308 : vector<8x32xf32>
    %310 = arith.mulf %305, %309 : vector<8x32xf32>
    %c56 = arith.constant 56 : index
    %c0_58 = arith.constant 0 : index
    %311 = vector.load %arg6[%c56, %c0_58] : memref<64x32xf32, #tpu.memory_space<vmem>>, vector<8x32xf32>
    tpu.vector_store %arg6[%c56, %c0_58], %310 {strides = array<i32>} : memref<64x32xf32, #tpu.memory_space<vmem>>, vector<8x32xf32>,
    %c0_59 = arith.constant 0 : index
    %c0_60 = arith.constant 0 : index
    %312 = vector.load %arg8[%c0_59, %c0_60] : memref<8x32xf32, #tpu.memory_space<vmem>>, vector<8x32xf32>
    tpu.vector_store %arg8[%c0_59, %c0_60], %310 {strides = array<i32>} : memref<8x32xf32, #tpu.memory_space<vmem>>, vector<8x32xf32>,
    %c0_61 = arith.constant 0 : index
    %c0_62 = arith.constant 0 : index
    %313 = vector.load %arg9[%c0_61, %c0_62] : memref<8x32xf32, #tpu.memory_space<vmem>>, vector<8x32xf32>
    tpu.vector_store %arg9[%c0_61, %c0_62], %308 {strides = array<i32>} : memref<8x32xf32, #tpu.memory_space<vmem>>, vector<8x32xf32>,
    %c0_63 = arith.constant 0 : index
    %c0_64 = arith.constant 0 : index
    %314 = vector.load %arg6[%c0_63, %c0_64] : memref<64x32xf32, #tpu.memory_space<vmem>>, vector<64x32xf32>
    %c0_65 = arith.constant 0 : index
    %c0_66 = arith.constant 0 : index
    %315 = vector.load %arg4[%c0_65, %c0_66] : memref<32x128xf32, #tpu.memory_space<vmem>>, vector<32x128xf32>
    %cst_67 = arith.constant dense<0.000000e+00> : vector<64x128xf32>
    %316 = tpu.matmul %314, %315, %cst_67 {dimension_numbers = #tpu.dot_dimension_numbers<[1], [0], [0], [1], [0, 0, 1, 1], [], []>} : vector<64x32xf32>, vector<32x128xf32>, vector<64x128xf32> -> vector<64x128xf32>
    %c0_68 = arith.constant 0 : index
    %c0_69 = arith.constant 0 : index
    %317 = vector.load %arg5[%c0_68, %c0_69] : memref<1x128xf32, #tpu.memory_space<vmem>>, vector<1x128xf32>
    %318 = vector.broadcast %317 : vector<1x128xf32> to vector<64x128xf32>
    %319 = arith.addf %316, %318 : vector<64x128xf32>
    %c0_70 = arith.constant 0 : index
    %c0_71 = arith.constant 0 : index
    %320 = vector.load %arg7[%c0_70, %c0_71] : memref<64x128xf32, #tpu.memory_space<vmem>>, vector<64x128xf32>
    tpu.vector_store %arg7[%c0_70, %c0_71], %319 {strides = array<i32>} : memref<64x128xf32, #tpu.memory_space<vmem>>, vector<64x128xf32>,
    return
  }
  func.func @transform_0(%arg0: i32) -> (i32, i32) {
    %c0_i32 = arith.constant 0 : i32
    %c0_i32_0 = arith.constant 0 : i32
    return %arg0, %c0_i32 : i32, i32
  }
  func.func @transform_1(%arg0: i32) -> (i32, i32) {
    %c0_i32 = arith.constant 0 : i32
    %c0_i32_0 = arith.constant 0 : i32
    %c0_i32_1 = arith.constant 0 : i32
    return %c0_i32, %c0_i32_0 : i32, i32
  }
  func.func @transform_2(%arg0: i32) -> (i32, i32) {
    %c0_i32 = arith.constant 0 : i32
    %c0_i32_0 = arith.constant 0 : i32
    %c0_i32_1 = arith.constant 0 : i32
    return %c0_i32, %c0_i32_0 : i32, i32
  }
  func.func @transform_3(%arg0: i32) -> (i32, i32) {
    %c0_i32 = arith.constant 0 : i32
    %c0_i32_0 = arith.constant 0 : i32
    %c0_i32_1 = arith.constant 0 : i32
    return %c0_i32, %c0_i32_0 : i32, i32
  }
  func.func @transform_4(%arg0: i32) -> (i32, i32) {
    %c0_i32 = arith.constant 0 : i32
    %c0_i32_0 = arith.constant 0 : i32
    %c0_i32_1 = arith.constant 0 : i32
    return %c0_i32, %c0_i32_0 : i32, i32
  }
  func.func @transform_5(%arg0: i32) -> (i32, i32) {
    %c0_i32 = arith.constant 0 : i32
    %c0_i32_0 = arith.constant 0 : i32
    return %arg0, %c0_i32 : i32, i32
  }
  func.func @transform_6(%arg0: i32) -> (i32, i32) {
    %c0_i32 = arith.constant 0 : i32
    %c0_i32_0 = arith.constant 0 : i32
    return %arg0, %c0_i32 : i32, i32
  }
}

</mosaic_0001>

<llo_original>
// kernel: forward.1
$region0: #{forward.1}
  #allocation0 [shape = 'u32[]', space=smem, size = 0x4, offset = 0x4, fixed_abs, tag = 'smem constant byte address 0x4 - core index']
  #allocation1 [shape = 'u32[144,128]{1,0:T(1,128)}', space=vmem, size = 0x12000, scoped, tag = 'internal scratch']
  #allocation2 [shape = 'f32[8,32]{1,0:T(8,128)}', space=vmem, size = 0x1000, scoped, tag = 'scratch operand']
  #allocation3 [shape = 'f32[8,32]{1,0:T(8,128)}', space=vmem, size = 0x1000, scoped, tag = 'scratch operand']
  %s0 = inlined_call_operand.vmem [shape: s32[64,1], index: 0, kind: input, shape index: {}]
  %s1 = inlined_call_operand.vmem [shape: f32[8,128], index: 1, kind: input, shape index: {}]
  %s2 = inlined_call_operand.vmem [shape: f32[32,128], index: 2, kind: input, shape index: {}]
  %s3 = inlined_call_operand.vmem [shape: f32[32,128], index: 3, kind: input, shape index: {}]
  %s4 = inlined_call_operand.vmem [shape: f32[1,128], index: 4, kind: input, shape index: {}]
  %s5 = inlined_call_operand.hbm [shape: f32[64,32], index: 5, kind: output, shape index: {0}]
  %s6 = inlined_call_operand.vmem [shape: f32[64,128], index: 6, kind: output, shape index: {1}]
  %7 = xla_tuple %s5, %s6
  %s8 = sld [smem:[#allocation0]]
  $region42: #{forward.1} parent=0
    _
  %s10 = ssub.s32 1, %s8
  %s11 = scalar_select 0, %s10, %s8
  $region1: #{forward.1} parent=0
    #allocation4 [shape = 'u8[32768]{0}', space=vmem, size = 0x8000, scoped, tag = 'output window, operand 0, single buffered']
    #allocation5 [shape = 's32[1]{0}', space=sflag, size = 0x4, scoped, tag = 'scoped memory for forward.1']
    %12 = vsyncpa [#allocation5], 0
    // Predicated region
    $region2: #{forward.1} parent=1 // pred_check
      _
    $region3: #{forward.1} parent=1 // pred_check_branch
      %14 = sbr.rel (0) target = $region5
    $region4: #{forward.1} parent=1 // pred_region
      _
    $region5: #{forward.1} parent=1 // pred_fallthru
      _
    // Predicated region
    $region6: #{forward.1} parent=1 // pred_check
      _
    $region7: #{forward.1} parent=1 // pred_check_branch
      %16 = sbr.rel (0) target = $region9
    $region8: #{forward.1} parent=1 // pred_region
      _
    $region9: #{forward.1} parent=1 // pred_fallthru
      _
    // Predicated region
    $region10: #{forward.1} parent=1 // pred_check
      _
    $region11: #{forward.1} parent=1 // pred_check_branch
      %18 = sbr.rel (0) target = $region13
    $region12: #{forward.1} parent=1 // pred_region
      _
    $region13: #{forward.1} parent=1 // pred_fallthru
      _
    // Predicated region
    $region14: #{forward.1} parent=1 // pred_check
      _
    $region15: #{forward.1} parent=1 // pred_check_branch
      %20 = sbr.rel (0) target = $region17
    $region16: #{forward.1} parent=1 // pred_region
      _
    $region17: #{forward.1} parent=1 // pred_fallthru
      _
    // Predicated region
    $region18: #{forward.1} parent=1 // pred_check
      _
    $region19: #{forward.1} parent=1 // pred_check_branch
      %22 = sbr.rel (0) target = $region21
    $region20: #{forward.1} parent=1 // pred_region
      _
    $region21: #{forward.1} parent=1 // pred_fallthru
      _
    %p23 = scmp.eq.s32.totalorder 0, 0
    // Predicated region
    $region22: #{forward.1} parent=1 // pred_check
      %p24 = pneg %p23
    $region23: #{forward.1} parent=1 // pred_check_branch
      %26 = sbr.rel (%p24) target = $region25
    $region24: #{forward.1} parent=1 // pred_region
      %vm27 = vcmask 261120
      %28 = vst.msk [vmem:[#allocation2] sm:$0xff] %vm27, 0.0
      %29 = vst.msk [vmem:[#allocation3] sm:$0xff] %vm27, 0.0
    $region25: #{forward.1} parent=1 // pred_fallthru
      _
    %v30 = vld [vmem:[%s0] sm:$0xff]
    %v31 = vld [vmem:[%s0 + $0x8] sm:$0xff]
    %v32 = vld [vmem:[%s0 + $0x10] sm:$0xff]
    %v33 = vld [vmem:[%s0 + $0x18] sm:$0xff]
    %v34 = vld [vmem:[%s0 + $0x20] sm:$0xff]
    %v35 = vld [vmem:[%s0 + $0x28] sm:$0xff]
    %v36 = vld [vmem:[%s0 + $0x30] sm:$0xff]
    %v37 = vld [vmem:[%s0 + $0x38] sm:$0xff]
    %vm38 = vcmp.eq.s32.totalorder %v30, 0
    %vm39 = vcmp.eq.s32.totalorder %v31, 0
    %vm40 = vcmp.eq.s32.totalorder %v32, 0
    %vm41 = vcmp.eq.s32.totalorder %v33, 0
    %vm42 = vcmp.eq.s32.totalorder %v34, 0
    %vm43 = vcmp.eq.s32.totalorder %v35, 0
    %vm44 = vcmp.eq.s32.totalorder %v36, 0
    %vm45 = vcmp.eq.s32.totalorder %v37, 0
    %v46 = vsel %vm38, 1, 0
    %v47 = vsel %vm39, 1, 0
    %v48 = vsel %vm40, 1, 0
    %v49 = vsel %vm41, 1, 0
    %v50 = vsel %vm42, 1, 0
    %v51 = vsel %vm43, 1, 0
    %v52 = vsel %vm44, 1, 0
    %v53 = vsel %vm45, 1, 0
    %v54 = vcvt.s32.f32 %v46
    %v55 = vcvt.s32.f32 %v47
    %v56 = vcvt.s32.f32 %v48
    %v57 = vcvt.s32.f32 %v49
    %v58 = vcvt.s32.f32 %v50
    %v59 = vcvt.s32.f32 %v51
    %v60 = vcvt.s32.f32 %v52
    %v61 = vcvt.s32.f32 %v53
    %v62 = vld [vmem:[%s1] sm:$0x1]
    %64 = vset.pattern.permute.xlu0 0
    %65 = vperm.xlu0 %64, %v54
    %v66 = vpop.permute.xlu0 %65
    %69 = vset.pattern.permute.xlu0 0
    %70 = vperm.xlu0 %69, %v55
    %v71 = vpop.permute.xlu0 %70
    %74 = vset.pattern.permute.xlu0 0
    %75 = vperm.xlu0 %74, %v56
    %v76 = vpop.permute.xlu0 %75
    %79 = vset.pattern.permute.xlu0 0
    %80 = vperm.xlu0 %79, %v57
    %v81 = vpop.permute.xlu0 %80
    %84 = vset.pattern.permute.xlu0 0
    %85 = vperm.xlu0 %84, %v58
    %v86 = vpop.permute.xlu0 %85
    %89 = vset.pattern.permute.xlu0 0
    %90 = vperm.xlu0 %89, %v59
    %v91 = vpop.permute.xlu0 %90
    %94 = vset.pattern.permute.xlu0 0
    %95 = vperm.xlu0 %94, %v60
    %v96 = vpop.permute.xlu0 %95
    %99 = vset.pattern.permute.xlu0 0
    %100 = vperm.xlu0 %99, %v61
    %v101 = vpop.permute.xlu0 %100
    %v103 = vlaneseq
    %v104 = vshrl.u32 %v103, 7
    %v105 = vsub.s32 0, %v104
    %v106 = vrot.slane %v62, %v105
    %v107 = vmul.f32 %v66, %v106
    %v108 = vmul.f32 %v71, %v106
    %v109 = vmul.f32 %v76, %v106
    %v110 = vmul.f32 %v81, %v106
    %v111 = vmul.f32 %v86, %v106
    %v112 = vmul.f32 %v91, %v106
    %v113 = vmul.f32 %v96, %v106
    %v114 = vmul.f32 %v101, %v106
    %v115 = vadd.f32 %v107, 0.0
    %v116 = vadd.f32 %v108, 0.0
    %v117 = vadd.f32 %v109, 0.0
    %v118 = vadd.f32 %v110, 0.0
    %v119 = vadd.f32 %v111, 0.0
    %v120 = vadd.f32 %v112, 0.0
    %v121 = vadd.f32 %v113, 0.0
    %v122 = vadd.f32 %v114, 0.0
    %vm123 = vcmp.eq.s32.totalorder %v30, 1
    %vm124 = vcmp.eq.s32.totalorder %v31, 1
    %vm125 = vcmp.eq.s32.totalorder %v32, 1
    %vm126 = vcmp.eq.s32.totalorder %v33, 1
    %vm127 = vcmp.eq.s32.totalorder %v34, 1
    %vm128 = vcmp.eq.s32.totalorder %v35, 1
    %vm129 = vcmp.eq.s32.totalorder %v36, 1
    %vm130 = vcmp.eq.s32.totalorder %v37, 1
    %v131 = vsel %vm123, 1, 0
    %v132 = vsel %vm124, 1, 0
    %v133 = vsel %vm125, 1, 0
    %v134 = vsel %vm126, 1, 0
    %v135 = vsel %vm127, 1, 0
    %v136 = vsel %vm128, 1, 0
    %v137 = vsel %vm129, 1, 0
    %v138 = vsel %vm130, 1, 0
    %v139 = vcvt.s32.f32 %v131
    %v140 = vcvt.s32.f32 %v132
    %v141 = vcvt.s32.f32 %v133
    %v142 = vcvt.s32.f32 %v134
    %v143 = vcvt.s32.f32 %v135
    %v144 = vcvt.s32.f32 %v136
    %v145 = vcvt.s32.f32 %v137
    %v146 = vcvt.s32.f32 %v138
    %v147 = vld [vmem:[%s1 + $0x1] sm:$0x1]
    %149 = vset.pattern.permute.xlu0 0
    %150 = vperm.xlu0 %149, %v139
    %v151 = vpop.permute.xlu0 %150
    %154 = vset.pattern.permute.xlu0 0
    %155 = vperm.xlu0 %154, %v140
    %v156 = vpop.permute.xlu0 %155
    %159 = vset.pattern.permute.xlu0 0
    %160 = vperm.xlu0 %159, %v141
    %v161 = vpop.permute.xlu0 %160
    %164 = vset.pattern.permute.xlu0 0
    %165 = vperm.xlu0 %164, %v142
    %v166 = vpop.permute.xlu0 %165
    %169 = vset.pattern.permute.xlu0 0
    %170 = vperm.xlu0 %169, %v143
    %v171 = vpop.permute.xlu0 %170
    %174 = vset.pattern.permute.xlu0 0
    %175 = vperm.xlu0 %174, %v144
    %v176 = vpop.permute.xlu0 %175
    %179 = vset.pattern.permute.xlu0 0
    %180 = vperm.xlu0 %179, %v145
    %v181 = vpop.permute.xlu0 %180
    %184 = vset.pattern.permute.xlu0 0
    %185 = vperm.xlu0 %184, %v146
    %v186 = vpop.permute.xlu0 %185
    %v188 = vlaneseq
    %v189 = vshrl.u32 %v188, 7
    %v190 = vsub.s32 0, %v189
    %v191 = vrot.slane %v147, %v190
    %v192 = vmul.f32 %v151, %v191
    %v193 = vmul.f32 %v156, %v191
    %v194 = vmul.f32 %v161, %v191
    %v195 = vmul.f32 %v166, %v191
    %v196 = vmul.f32 %v171, %v191
    %v197 = vmul.f32 %v176, %v191
    %v198 = vmul.f32 %v181, %v191
    %v199 = vmul.f32 %v186, %v191
    %v200 = vadd.f32 %v115, %v192
    %v201 = vadd.f32 %v116, %v193
    %v202 = vadd.f32 %v117, %v194
    %v203 = vadd.f32 %v118, %v195
    %v204 = vadd.f32 %v119, %v196
    %v205 = vadd.f32 %v120, %v197
    %v206 = vadd.f32 %v121, %v198
    %v207 = vadd.f32 %v122, %v199
    %vm208 = vcmp.eq.s32.totalorder %v30, 2
    %vm209 = vcmp.eq.s32.totalorder %v31, 2
    %vm210 = vcmp.eq.s32.totalorder %v32, 2
    %vm211 = vcmp.eq.s32.totalorder %v33, 2
    %vm212 = vcmp.eq.s32.totalorder %v34, 2
    %vm213 = vcmp.eq.s32.totalorder %v35, 2
    %vm214 = vcmp.eq.s32.totalorder %v36, 2
    %vm215 = vcmp.eq.s32.totalorder %v37, 2
    %v216 = vsel %vm208, 1, 0
    %v217 = vsel %vm209, 1, 0
    %v218 = vsel %vm210, 1, 0
    %v219 = vsel %vm211, 1, 0
    %v220 = vsel %vm212, 1, 0
    %v221 = vsel %vm213, 1, 0
    %v222 = vsel %vm214, 1, 0
    %v223 = vsel %vm215, 1, 0
    %v224 = vcvt.s32.f32 %v216
    %v225 = vcvt.s32.f32 %v217
    %v226 = vcvt.s32.f32 %v218
    %v227 = vcvt.s32.f32 %v219
    %v228 = vcvt.s32.f32 %v220
    %v229 = vcvt.s32.f32 %v221
    %v230 = vcvt.s32.f32 %v222
    %v231 = vcvt.s32.f32 %v223
    %v232 = vld [vmem:[%s1 + $0x2] sm:$0x1]
    %234 = vset.pattern.permute.xlu0 0
    %235 = vperm.xlu0 %234, %v224
    %v236 = vpop.permute.xlu0 %235
    %239 = vset.pattern.permute.xlu0 0
    %240 = vperm.xlu0 %239, %v225
    %v241 = vpop.permute.xlu0 %240
    %244 = vset.pattern.permute.xlu0 0
    %245 = vperm.xlu0 %244, %v226
    %v246 = vpop.permute.xlu0 %245
    %249 = vset.pattern.permute.xlu0 0
    %250 = vperm.xlu0 %249, %v227
    %v251 = vpop.permute.xlu0 %250
    %254 = vset.pattern.permute.xlu0 0
    %255 = vperm.xlu0 %254, %v228
    %v256 = vpop.permute.xlu0 %255
    %259 = vset.pattern.permute.xlu0 0
    %260 = vperm.xlu0 %259, %v229
    %v261 = vpop.permute.xlu0 %260
    %264 = vset.pattern.permute.xlu0 0
    %265 = vperm.xlu0 %264, %v230
    %v266 = vpop.permute.xlu0 %265
    %269 = vset.pattern.permute.xlu0 0
    %270 = vperm.xlu0 %269, %v231
    %v271 = vpop.permute.xlu0 %270
    %v273 = vlaneseq
    %v274 = vshrl.u32 %v273, 7
    %v275 = vsub.s32 0, %v274
    %v276 = vrot.slane %v232, %v275
    %v277 = vmul.f32 %v236, %v276
    %v278 = vmul.f32 %v241, %v276
    %v279 = vmul.f32 %v246, %v276
    %v280 = vmul.f32 %v251, %v276
    %v281 = vmul.f32 %v256, %v276
    %v282 = vmul.f32 %v261, %v276
    %v283 = vmul.f32 %v266, %v276
    %v284 = vmul.f32 %v271, %v276
    %v285 = vadd.f32 %v200, %v277
    %v286 = vadd.f32 %v201, %v278
    %v287 = vadd.f32 %v202, %v279
    %v288 = vadd.f32 %v203, %v280
    %v289 = vadd.f32 %v204, %v281
    %v290 = vadd.f32 %v205, %v282
    %v291 = vadd.f32 %v206, %v283
    %v292 = vadd.f32 %v207, %v284
    %vm293 = vcmp.eq.s32.totalorder %v30, 3
    %vm294 = vcmp.eq.s32.totalorder %v31, 3
    %vm295 = vcmp.eq.s32.totalorder %v32, 3
    %vm296 = vcmp.eq.s32.totalorder %v33, 3
    %vm297 = vcmp.eq.s32.totalorder %v34, 3
    %vm298 = vcmp.eq.s32.totalorder %v35, 3
    %vm299 = vcmp.eq.s32.totalorder %v36, 3
    %vm300 = vcmp.eq.s32.totalorder %v37, 3
    %v301 = vsel %vm293, 1, 0
    %v302 = vsel %vm294, 1, 0
    %v303 = vsel %vm295, 1, 0
    %v304 = vsel %vm296, 1, 0
    %v305 = vsel %vm297, 1, 0
    %v306 = vsel %vm298, 1, 0
    %v307 = vsel %vm299, 1, 0
    %v308 = vsel %vm300, 1, 0
    %v309 = vcvt.s32.f32 %v301
    %v310 = vcvt.s32.f32 %v302
    %v311 = vcvt.s32.f32 %v303
    %v312 = vcvt.s32.f32 %v304
    %v313 = vcvt.s32.f32 %v305
    %v314 = vcvt.s32.f32 %v306
    %v315 = vcvt.s32.f32 %v307
    %v316 = vcvt.s32.f32 %v308
    %v317 = vld [vmem:[%s1 + $0x3] sm:$0x1]
    %319 = vset.pattern.permute.xlu0 0
    %320 = vperm.xlu0 %319, %v309
    %v321 = vpop.permute.xlu0 %320
    %324 = vset.pattern.permute.xlu0 0
    %325 = vperm.xlu0 %324, %v310
    %v326 = vpop.permute.xlu0 %325
    %329 = vset.pattern.permute.xlu0 0
    %330 = vperm.xlu0 %329, %v311
    %v331 = vpop.permute.xlu0 %330
    %334 = vset.pattern.permute.xlu0 0
    %335 = vperm.xlu0 %334, %v312
    %v336 = vpop.permute.xlu0 %335
    %339 = vset.pattern.permute.xlu0 0
    %340 = vperm.xlu0 %339, %v313
    %v341 = vpop.permute.xlu0 %340
    %344 = vset.pattern.permute.xlu0 0
    %345 = vperm.xlu0 %344, %v314
    %v346 = vpop.permute.xlu0 %345
    %349 = vset.pattern.permute.xlu0 0
    %350 = vperm.xlu0 %349, %v315
    %v351 = vpop.permute.xlu0 %350
    %354 = vset.pattern.permute.xlu0 0
    %355 = vperm.xlu0 %354, %v316
    %v356 = vpop.permute.xlu0 %355
    %v358 = vlaneseq
    %v359 = vshrl.u32 %v358, 7
    %v360 = vsub.s32 0, %v359
    %v361 = vrot.slane %v317, %v360
    %v362 = vmul.f32 %v321, %v361
    %v363 = vmul.f32 %v326, %v361
    %v364 = vmul.f32 %v331, %v361
    %v365 = vmul.f32 %v336, %v361
    %v366 = vmul.f32 %v341, %v361
    %v367 = vmul.f32 %v346, %v361
    %v368 = vmul.f32 %v351, %v361
    %v369 = vmul.f32 %v356, %v361
    %v370 = vadd.f32 %v285, %v362
    %v371 = vadd.f32 %v286, %v363
    %v372 = vadd.f32 %v287, %v364
    %v373 = vadd.f32 %v288, %v365
    %v374 = vadd.f32 %v289, %v366
    %v375 = vadd.f32 %v290, %v367
    %v376 = vadd.f32 %v291, %v368
    %v377 = vadd.f32 %v292, %v369
    %vm378 = vcmp.eq.s32.totalorder %v30, 4
    %vm379 = vcmp.eq.s32.totalorder %v31, 4
    %vm380 = vcmp.eq.s32.totalorder %v32, 4
    %vm381 = vcmp.eq.s32.totalorder %v33, 4
    %vm382 = vcmp.eq.s32.totalorder %v34, 4
    %vm383 = vcmp.eq.s32.totalorder %v35, 4
    %vm384 = vcmp.eq.s32.totalorder %v36, 4
    %vm385 = vcmp.eq.s32.totalorder %v37, 4
    %v386 = vsel %vm378, 1, 0
    %v387 = vsel %vm379, 1, 0
    %v388 = vsel %vm380, 1, 0
    %v389 = vsel %vm381, 1, 0
    %v390 = vsel %vm382, 1, 0
    %v391 = vsel %vm383, 1, 0
    %v392 = vsel %vm384, 1, 0
    %v393 = vsel %vm385, 1, 0
    %v394 = vcvt.s32.f32 %v386
    %v395 = vcvt.s32.f32 %v387
    %v396 = vcvt.s32.f32 %v388
    %v397 = vcvt.s32.f32 %v389
    %v398 = vcvt.s32.f32 %v390
    %v399 = vcvt.s32.f32 %v391
    %v400 = vcvt.s32.f32 %v392
    %v401 = vcvt.s32.f32 %v393
    %v402 = vld [vmem:[%s1 + $0x4] sm:$0x1]
    %404 = vset.pattern.permute.xlu0 0
    %405 = vperm.xlu0 %404, %v394
    %v406 = vpop.permute.xlu0 %405
    %409 = vset.pattern.permute.xlu0 0
    %410 = vperm.xlu0 %409, %v395
    %v411 = vpop.permute.xlu0 %410
    %414 = vset.pattern.permute.xlu0 0
    %415 = vperm.xlu0 %414, %v396
    %v416 = vpop.permute.xlu0 %415
    %419 = vset.pattern.permute.xlu0 0
    %420 = vperm.xlu0 %419, %v397
    %v421 = vpop.permute.xlu0 %420
    %424 = vset.pattern.permute.xlu0 0
    %425 = vperm.xlu0 %424, %v398
    %v426 = vpop.permute.xlu0 %425
    %429 = vset.pattern.permute.xlu0 0
    %430 = vperm.xlu0 %429, %v399
    %v431 = vpop.permute.xlu0 %430
    %434 = vset.pattern.permute.xlu0 0
    %435 = vperm.xlu0 %434, %v400
    %v436 = vpop.permute.xlu0 %435
    %439 = vset.pattern.permute.xlu0 0
    %440 = vperm.xlu0 %439, %v401
    %v441 = vpop.permute.xlu0 %440
    %v443 = vlaneseq
    %v444 = vshrl.u32 %v443, 7
    %v445 = vsub.s32 0, %v444
    %v446 = vrot.slane %v402, %v445
    %v447 = vmul.f32 %v406, %v446
    %v448 = vmul.f32 %v411, %v446
    %v449 = vmul.f32 %v416, %v446
    %v450 = vmul.f32 %v421, %v446
    %v451 = vmul.f32 %v426, %v446
    %v452 = vmul.f32 %v431, %v446
    %v453 = vmul.f32 %v436, %v446
    %v454 = vmul.f32 %v441, %v446
    %v455 = vadd.f32 %v370, %v447
    %v456 = vadd.f32 %v371, %v448
    %v457 = vadd.f32 %v372, %v449
    %v458 = vadd.f32 %v373, %v450
    %v459 = vadd.f32 %v374, %v451
    %v460 = vadd.f32 %v375, %v452
    %v461 = vadd.f32 %v376, %v453
    %v462 = vadd.f32 %v377, %v454
    %vm463 = vcmp.eq.s32.totalorder %v30, 5
    %vm464 = vcmp.eq.s32.totalorder %v31, 5
    %vm465 = vcmp.eq.s32.totalorder %v32, 5
    %vm466 = vcmp.eq.s32.totalorder %v33, 5
    %vm467 = vcmp.eq.s32.totalorder %v34, 5
    %vm468 = vcmp.eq.s32.totalorder %v35, 5
    %vm469 = vcmp.eq.s32.totalorder %v36, 5
    %vm470 = vcmp.eq.s32.totalorder %v37, 5
    %v471 = vsel %vm463, 1, 0
    %v472 = vsel %vm464, 1, 0
    %v473 = vsel %vm465, 1, 0
    %v474 = vsel %vm466, 1, 0
    %v475 = vsel %vm467, 1, 0
    %v476 = vsel %vm468, 1, 0
    %v477 = vsel %vm469, 1, 0
    %v478 = vsel %vm470, 1, 0
    %v479 = vcvt.s32.f32 %v471
    %v480 = vcvt.s32.f32 %v472
    %v481 = vcvt.s32.f32 %v473
    %v482 = vcvt.s32.f32 %v474
    %v483 = vcvt.s32.f32 %v475
    %v484 = vcvt.s32.f32 %v476
    %v485 = vcvt.s32.f32 %v477
    %v486 = vcvt.s32.f32 %v478
    %v487 = vld [vmem:[%s1 + $0x5] sm:$0x1]
    %489 = vset.pattern.permute.xlu0 0
    %490 = vperm.xlu0 %489, %v479
    %v491 = vpop.permute.xlu0 %490
    %494 = vset.pattern.permute.xlu0 0
    %495 = vperm.xlu0 %494, %v480
    %v496 = vpop.permute.xlu0 %495
    %499 = vset.pattern.permute.xlu0 0
    %500 = vperm.xlu0 %499, %v481
    %v501 = vpop.permute.xlu0 %500
    %504 = vset.pattern.permute.xlu0 0
    %505 = vperm.xlu0 %504, %v482
    %v506 = vpop.permute.xlu0 %505
    %509 = vset.pattern.permute.xlu0 0
    %510 = vperm.xlu0 %509, %v483
    %v511 = vpop.permute.xlu0 %510
    %514 = vset.pattern.permute.xlu0 0
    %515 = vperm.xlu0 %514, %v484
    %v516 = vpop.permute.xlu0 %515
    %519 = vset.pattern.permute.xlu0 0
    %520 = vperm.xlu0 %519, %v485
    %v521 = vpop.permute.xlu0 %520
    %524 = vset.pattern.permute.xlu0 0
    %525 = vperm.xlu0 %524, %v486
    %v526 = vpop.permute.xlu0 %525
    %v528 = vlaneseq
    %v529 = vshrl.u32 %v528, 7
    %v530 = vsub.s32 0, %v529
    %v531 = vrot.slane %v487, %v530
    %v532 = vmul.f32 %v491, %v531
    %v533 = vmul.f32 %v496, %v531
    %v534 = vmul.f32 %v501, %v531
    %v535 = vmul.f32 %v506, %v531
    %v536 = vmul.f32 %v511, %v531
    %v537 = vmul.f32 %v516, %v531
    %v538 = vmul.f32 %v521, %v531
    %v539 = vmul.f32 %v526, %v531
    %v540 = vadd.f32 %v455, %v532
    %v541 = vadd.f32 %v456, %v533
    %v542 = vadd.f32 %v457, %v534
    %v543 = vadd.f32 %v458, %v535
    %v544 = vadd.f32 %v459, %v536
    %v545 = vadd.f32 %v460, %v537
    %v546 = vadd.f32 %v461, %v538
    %v547 = vadd.f32 %v462, %v539
    %vm548 = vcmp.eq.s32.totalorder %v30, 6
    %vm549 = vcmp.eq.s32.totalorder %v31, 6
    %vm550 = vcmp.eq.s32.totalorder %v32, 6
    %vm551 = vcmp.eq.s32.totalorder %v33, 6
    %vm552 = vcmp.eq.s32.totalorder %v34, 6
    %vm553 = vcmp.eq.s32.totalorder %v35, 6
    %vm554 = vcmp.eq.s32.totalorder %v36, 6
    %vm555 = vcmp.eq.s32.totalorder %v37, 6
    %v556 = vsel %vm548, 1, 0
    %v557 = vsel %vm549, 1, 0
    %v558 = vsel %vm550, 1, 0
    %v559 = vsel %vm551, 1, 0
    %v560 = vsel %vm552, 1, 0
    %v561 = vsel %vm553, 1, 0
    %v562 = vsel %vm554, 1, 0
    %v563 = vsel %vm555, 1, 0
    %v564 = vcvt.s32.f32 %v556
    %v565 = vcvt.s32.f32 %v557
    %v566 = vcvt.s32.f32 %v558
    %v567 = vcvt.s32.f32 %v559
    %v568 = vcvt.s32.f32 %v560
    %v569 = vcvt.s32.f32 %v561
    %v570 = vcvt.s32.f32 %v562
    %v571 = vcvt.s32.f32 %v563
    %v572 = vld [vmem:[%s1 + $0x6] sm:$0x1]
    %574 = vset.pattern.permute.xlu0 0
    %575 = vperm.xlu0 %574, %v564
    %v576 = vpop.permute.xlu0 %575
    %579 = vset.pattern.permute.xlu0 0
    %580 = vperm.xlu0 %579, %v565
    %v581 = vpop.permute.xlu0 %580
    %584 = vset.pattern.permute.xlu0 0
    %585 = vperm.xlu0 %584, %v566
    %v586 = vpop.permute.xlu0 %585
    %589 = vset.pattern.permute.xlu0 0
    %590 = vperm.xlu0 %589, %v567
    %v591 = vpop.permute.xlu0 %590
    %594 = vset.pattern.permute.xlu0 0
    %595 = vperm.xlu0 %594, %v568
    %v596 = vpop.permute.xlu0 %595
    %599 = vset.pattern.permute.xlu0 0
    %600 = vperm.xlu0 %599, %v569
    %v601 = vpop.permute.xlu0 %600
    %604 = vset.pattern.permute.xlu0 0
    %605 = vperm.xlu0 %604, %v570
    %v606 = vpop.permute.xlu0 %605
    %609 = vset.pattern.permute.xlu0 0
    %610 = vperm.xlu0 %609, %v571
    %v611 = vpop.permute.xlu0 %610
    %v613 = vlaneseq
    %v614 = vshrl.u32 %v613, 7
    %v615 = vsub.s32 0, %v614
    %v616 = vrot.slane %v572, %v615
    %v617 = vmul.f32 %v576, %v616
    %v618 = vmul.f32 %v581, %v616
    %v619 = vmul.f32 %v586, %v616
    %v620 = vmul.f32 %v591, %v616
    %v621 = vmul.f32 %v596, %v616
    %v622 = vmul.f32 %v601, %v616
    %v623 = vmul.f32 %v606, %v616
    %v624 = vmul.f32 %v611, %v616
    %v625 = vadd.f32 %v540, %v617
    %v626 = vadd.f32 %v541, %v618
    %v627 = vadd.f32 %v542, %v619
    %v628 = vadd.f32 %v543, %v620
    %v629 = vadd.f32 %v544, %v621
    %v630 = vadd.f32 %v545, %v622
    %v631 = vadd.f32 %v546, %v623
    %v632 = vadd.f32 %v547, %v624
    %vm633 = vcmp.eq.s32.totalorder %v30, 7
    %vm634 = vcmp.eq.s32.totalorder %v31, 7
    %vm635 = vcmp.eq.s32.totalorder %v32, 7
    %vm636 = vcmp.eq.s32.totalorder %v33, 7
    %vm637 = vcmp.eq.s32.totalorder %v34, 7
    %vm638 = vcmp.eq.s32.totalorder %v35, 7
    %vm639 = vcmp.eq.s32.totalorder %v36, 7
    %vm640 = vcmp.eq.s32.totalorder %v37, 7
    %v641 = vsel %vm633, 1, 0
    %v642 = vsel %vm634, 1, 0
    %v643 = vsel %vm635, 1, 0
    %v644 = vsel %vm636, 1, 0
    %v645 = vsel %vm637, 1, 0
    %v646 = vsel %vm638, 1, 0
    %v647 = vsel %vm639, 1, 0
    %v648 = vsel %vm640, 1, 0
    %v649 = vcvt.s32.f32 %v641
    %v650 = vcvt.s32.f32 %v642
    %v651 = vcvt.s32.f32 %v643
    %v652 = vcvt.s32.f32 %v644
    %v653 = vcvt.s32.f32 %v645
    %v654 = vcvt.s32.f32 %v646
    %v655 = vcvt.s32.f32 %v647
    %v656 = vcvt.s32.f32 %v648
    %v657 = vld [vmem:[%s1 + $0x7] sm:$0x1]
    %659 = vset.pattern.permute.xlu0 0
    %660 = vperm.xlu0 %659, %v649
    %v661 = vpop.permute.xlu0 %660
    %664 = vset.pattern.permute.xlu0 0
    %665 = vperm.xlu0 %664, %v650
    %v666 = vpop.permute.xlu0 %665
    %669 = vset.pattern.permute.xlu0 0
    %670 = vperm.xlu0 %669, %v651
    %v671 = vpop.permute.xlu0 %670
    %674 = vset.pattern.permute.xlu0 0
    %675 = vperm.xlu0 %674, %v652
    %v676 = vpop.permute.xlu0 %675
    %679 = vset.pattern.permute.xlu0 0
    %680 = vperm.xlu0 %679, %v653
    %v681 = vpop.permute.xlu0 %680
    %684 = vset.pattern.permute.xlu0 0
    %685 = vperm.xlu0 %684, %v654
    %v686 = vpop.permute.xlu0 %685
    %689 = vset.pattern.permute.xlu0 0
    %690 = vperm.xlu0 %689, %v655
    %v691 = vpop.permute.xlu0 %690
    %694 = vset.pattern.permute.xlu0 0
    %695 = vperm.xlu0 %694, %v656
    %v696 = vpop.permute.xlu0 %695
    %v698 = vlaneseq
    %v699 = vshrl.u32 %v698, 7
    %v700 = vsub.s32 0, %v699
    %v701 = vrot.slane %v657, %v700
    %v702 = vmul.f32 %v661, %v701
    %v703 = vmul.f32 %v666, %v701
    %v704 = vmul.f32 %v671, %v701
    %v705 = vmul.f32 %v676, %v701
    %v706 = vmul.f32 %v681, %v701
    %v707 = vmul.f32 %v686, %v701
    %v708 = vmul.f32 %v691, %v701
    %v709 = vmul.f32 %v696, %v701
    %v710 = vadd.f32 %v625, %v702
    %v711 = vadd.f32 %v626, %v703
    %v712 = vadd.f32 %v627, %v704
    %v713 = vadd.f32 %v628, %v705
    %v714 = vadd.f32 %v629, %v706
    %v715 = vadd.f32 %v630, %v707
    %v716 = vadd.f32 %v631, %v708
    %v717 = vadd.f32 %v632, %v709
    %v718 = vld [vmem:[%s2] sm:$0xff]
    %v719 = vld [vmem:[%s2 + $0x8] sm:$0xff]
    %v720 = vld [vmem:[%s2 + $0x10] sm:$0xff]
    %v721 = vld [vmem:[%s2 + $0x18] sm:$0xff]
    %v722 = vld [vmem:[#allocation2] sm:$0xff]
    %v723 = vld [vmem:[#allocation3] sm:$0xff]
    %vm724 = vcmask 261120
    %v726 = vsel %vm724, %v722, 0
    %728 = vmatprep.subr.mxu0 0.0
    %729 = vmatpush1.msra.mxu0 0.0
    %730 = vmatprep.subr.mxu0 0.0
    %731 = vmatpush1.msra.mxu0 0.0
    %732 = vmatprep.subr.mxu0 0.0
    %733 = vmatpush1.msra.mxu0 0.0
    %734 = vmatprep.subr.mxu0 0.0
    %735 = vmatpush1.msra.mxu0 0.0
    %736 = vmatprep.subr.mxu0 0.0
    %737 = vmatpush1.msra.mxu0 0.0
    %738 = vmatprep.subr.mxu0 0.0
    %739 = vmatpush1.msra.mxu0 0.0
    %740 = vmatprep.subr.mxu0 0.0
    %741 = vmatpush1.msra.mxu0 0.0
    %742 = vmatprep.subr.mxu0 0.0
    %743 = vmatpush1.msra.mxu0 0.0
    %744 = vmatprep.subr.mxu0 0.0
    %745 = vmatpush1.msra.mxu0 0.0
    %746 = vmatprep.subr.mxu0 0.0
    %747 = vmatpush1.msra.mxu0 0.0
    %748 = vmatprep.subr.mxu0 0.0
    %749 = vmatpush1.msra.mxu0 0.0
    %750 = vmatprep.subr.mxu0 0.0
    %751 = vmatpush1.msra.mxu0 0.0
    %752 = vmatprep.subr.mxu0 0.0
    %753 = vmatpush1.msra.mxu0 %v721
    %754 = vmatprep.subr.mxu0 0.0
    %755 = vmatpush1.msra.mxu0 %v720
    %756 = vmatprep.subr.mxu0 0.0
    %757 = vmatpush1.msra.mxu0 %v719
    %758 = vmatprep.subr.mxu0 0.0
    %759 = vmatpush1.msra.mxu0 %v718
    %760 = vmatprep.subr.mxu0 0.0
    %761 = vmatpush2.msra.mxu0 0.0
    %762 = vmatprep.subr.mxu0 0.0
    %763 = vmatpush2.msra.mxu0 0.0
    %764 = vmatprep.subr.mxu0 0.0
    %765 = vmatpush2.msra.mxu0 0.0
    %766 = vmatprep.subr.mxu0 0.0
    %767 = vmatpush2.msra.mxu0 0.0
    %768 = vmatprep.subr.mxu0 0.0
    %769 = vmatpush2.msra.mxu0 0.0
    %770 = vmatprep.subr.mxu0 0.0
    %771 = vmatpush2.msra.mxu0 0.0
    %772 = vmatprep.subr.mxu0 0.0
    %773 = vmatpush2.msra.mxu0 0.0
    %774 = vmatprep.subr.mxu0 0.0
    %775 = vmatpush2.msra.mxu0 0.0
    %776 = vmatprep.subr.mxu0 0.0
    %777 = vmatpush2.msra.mxu0 0.0
    %778 = vmatprep.subr.mxu0 0.0
    %779 = vmatpush2.msra.mxu0 0.0
    %780 = vmatprep.subr.mxu0 0.0
    %781 = vmatpush2.msra.mxu0 0.0
    %782 = vmatprep.subr.mxu0 0.0
    %783 = vmatpush2.msra.mxu0 0.0
    %784 = vmatprep.subr.mxu0 0.0
    %785 = vmatpush2.msra.mxu0 0.0
    %786 = vmatprep.subr.mxu0 0.0
    %787 = vmatpush2.msra.mxu0 0.0
    %788 = vmatprep.subr.mxu0 0.0
    %789 = vmatpush2.msra.mxu0 0.0
    %790 = vmatprep.subr.mxu0 0.0
    %791 = vmatpush2.msra.mxu0 0.0
    %792 = vmatprep.mubr.f32.mxu0 0.0
    %793 = vmatmul.mubr.f32.gmra.mxu0 %v726
    %v794 = vpop.f32.mrf.mxu0
    %v795 = vadd.f32 0.0, %v794
    %v796 = vpop.f32.mrf.mxu0
    %797 = vdwg.mxu0
    %v798 = vadd.f32 %v710, %v795
    %v799 = vxor.u32 %v798, 2147483648
    %v800 = vmul.f32 %v799, 1.442695
    %v801 = vpow.pop %v800
    %v802 = vadd.f32 %v801, 1.0
    %v803 = vrcp.pop %v802
    %v804 = vmul.f32 1.0, %v803
    %v805 = vtanh.pop %v798
    %807 = vrot.lane.b32.xlu0 %v723, 32
    %v808 = vpop.permute.xlu0 %807
    %v810 = vmul.f32 %v804, %v808
    %812 = vrot.lane.b32.xlu0 %v805, 64
    %v813 = vpop.permute.xlu0 %812
    %v815 = vmul.f32 %v804, %v813
    %817 = vrot.lane.b32.xlu0 %v815, 32
    %v818 = vpop.permute.xlu0 %817
    %v820 = vadd.f32 %v810, %v818
    %v821 = vtanh.pop %v820
    %823 = vrot.lane.b32.xlu0 %v821, 64
    %v824 = vpop.permute.xlu0 %823
    %v826 = vmul.f32 %v804, %v824
    %828 = vrot.lane.b32.xlu0 %v826, 32
    %v829 = vpop.permute.xlu0 %828
    %831 = vst.msk [vmem:[#allocation4] sm:$0xff] %vm724, %v829
    %v832 = vsel %vm724, %v829, 0
    %834 = vmatprep.subr.mxu0 0.0
    %835 = vmatpush1.msra.mxu0 0.0
    %836 = vmatprep.subr.mxu0 0.0
    %837 = vmatpush1.msra.mxu0 0.0
    %838 = vmatprep.subr.mxu0 0.0
    %839 = vmatpush1.msra.mxu0 0.0
    %840 = vmatprep.subr.mxu0 0.0
    %841 = vmatpush1.msra.mxu0 0.0
    %842 = vmatprep.subr.mxu0 0.0
    %843 = vmatpush1.msra.mxu0 0.0
    %844 = vmatprep.subr.mxu0 0.0
    %845 = vmatpush1.msra.mxu0 0.0
    %846 = vmatprep.subr.mxu0 0.0
    %847 = vmatpush1.msra.mxu0 0.0
    %848 = vmatprep.subr.mxu0 0.0
    %849 = vmatpush1.msra.mxu0 0.0
    %850 = vmatprep.subr.mxu0 0.0
    %851 = vmatpush1.msra.mxu0 0.0
    %852 = vmatprep.subr.mxu0 0.0
    %853 = vmatpush1.msra.mxu0 0.0
    %854 = vmatprep.subr.mxu0 0.0
    %855 = vmatpush1.msra.mxu0 0.0
    %856 = vmatprep.subr.mxu0 0.0
    %857 = vmatpush1.msra.mxu0 0.0
    %858 = vmatprep.subr.mxu0 0.0
    %859 = vmatpush1.msra.mxu0 %v721
    %860 = vmatprep.subr.mxu0 0.0
    %861 = vmatpush1.msra.mxu0 %v720
    %862 = vmatprep.subr.mxu0 0.0
    %863 = vmatpush1.msra.mxu0 %v719
    %864 = vmatprep.subr.mxu0 0.0
    %865 = vmatpush1.msra.mxu0 %v718
    %866 = vmatprep.subr.mxu0 0.0
    %867 = vmatpush2.msra.mxu0 0.0
    %868 = vmatprep.subr.mxu0 0.0
    %869 = vmatpush2.msra.mxu0 0.0
    %870 = vmatprep.subr.mxu0 0.0
    %871 = vmatpush2.msra.mxu0 0.0
    %872 = vmatprep.subr.mxu0 0.0
    %873 = vmatpush2.msra.mxu0 0.0
    %874 = vmatprep.subr.mxu0 0.0
    %875 = vmatpush2.msra.mxu0 0.0
    %876 = vmatprep.subr.mxu0 0.0
    %877 = vmatpush2.msra.mxu0 0.0
    %878 = vmatprep.subr.mxu0 0.0
    %879 = vmatpush2.msra.mxu0 0.0
    %880 = vmatprep.subr.mxu0 0.0
    %881 = vmatpush2.msra.mxu0 0.0
    %882 = vmatprep.subr.mxu0 0.0
    %883 = vmatpush2.msra.mxu0 0.0
    %884 = vmatprep.subr.mxu0 0.0
    %885 = vmatpush2.msra.mxu0 0.0
    %886 = vmatprep.subr.mxu0 0.0
    %887 = vmatpush2.msra.mxu0 0.0
    %888 = vmatprep.subr.mxu0 0.0
    %889 = vmatpush2.msra.mxu0 0.0
    %890 = vmatprep.subr.mxu0 0.0
    %891 = vmatpush2.msra.mxu0 0.0
    %892 = vmatprep.subr.mxu0 0.0
    %893 = vmatpush2.msra.mxu0 0.0
    %894 = vmatprep.subr.mxu0 0.0
    %895 = vmatpush2.msra.mxu0 0.0
    %896 = vmatprep.subr.mxu0 0.0
    %897 = vmatpush2.msra.mxu0 0.0
    %898 = vmatprep.mubr.f32.mxu0 0.0
    %899 = vmatmul.mubr.f32.gmra.mxu0 %v832
    %v900 = vpop.f32.mrf.mxu0
    %v901 = vadd.f32 0.0, %v900
    %v902 = vpop.f32.mrf.mxu0
    %903 = vdwg.mxu0
    %v904 = vadd.f32 %v711, %v901
    %v905 = vxor.u32 %v904, 2147483648
    %v906 = vmul.f32 %v905, 1.442695
    %v907 = vpow.pop %v906
    %v908 = vadd.f32 %v907, 1.0
    %v909 = vrcp.pop %v908
    %v910 = vmul.f32 1.0, %v909
    %v911 = vtanh.pop %v904
    %v912 = vmul.f32 %v910, %v820
    %914 = vrot.lane.b32.xlu0 %v911, 64
    %v915 = vpop.permute.xlu0 %914
    %v917 = vmul.f32 %v910, %v915
    %919 = vrot.lane.b32.xlu0 %v917, 32
    %v920 = vpop.permute.xlu0 %919
    %v922 = vadd.f32 %v912, %v920
    %v923 = vtanh.pop %v922
    %925 = vrot.lane.b32.xlu0 %v923, 64
    %v926 = vpop.permute.xlu0 %925
    %v928 = vmul.f32 %v910, %v926
    %930 = vrot.lane.b32.xlu0 %v928, 32
    %v931 = vpop.permute.xlu0 %930
    %933 = vst.msk [vmem:[#allocation4 + $0x8] sm:$0xff] %vm724, %v931
    %v934 = vsel %vm724, %v931, 0
    %936 = vmatprep.subr.mxu0 0.0
    %937 = vmatpush1.msra.mxu0 0.0
    %938 = vmatprep.subr.mxu0 0.0
    %939 = vmatpush1.msra.mxu0 0.0
    %940 = vmatprep.subr.mxu0 0.0
    %941 = vmatpush1.msra.mxu0 0.0
    %942 = vmatprep.subr.mxu0 0.0
    %943 = vmatpush1.msra.mxu0 0.0
    %944 = vmatprep.subr.mxu0 0.0
    %945 = vmatpush1.msra.mxu0 0.0
    %946 = vmatprep.subr.mxu0 0.0
    %947 = vmatpush1.msra.mxu0 0.0
    %948 = vmatprep.subr.mxu0 0.0
    %949 = vmatpush1.msra.mxu0 0.0
    %950 = vmatprep.subr.mxu0 0.0
    %951 = vmatpush1.msra.mxu0 0.0
    %952 = vmatprep.subr.mxu0 0.0
    %953 = vmatpush1.msra.mxu0 0.0
    %954 = vmatprep.subr.mxu0 0.0
    %955 = vmatpush1.msra.mxu0 0.0
    %956 = vmatprep.subr.mxu0 0.0
    %957 = vmatpush1.msra.mxu0 0.0
    %958 = vmatprep.subr.mxu0 0.0
    %959 = vmatpush1.msra.mxu0 0.0
    %960 = vmatprep.subr.mxu0 0.0
    %961 = vmatpush1.msra.mxu0 %v721
    %962 = vmatprep.subr.mxu0 0.0
    %963 = vmatpush1.msra.mxu0 %v720
    %964 = vmatprep.subr.mxu0 0.0
    %965 = vmatpush1.msra.mxu0 %v719
    %966 = vmatprep.subr.mxu0 0.0
    %967 = vmatpush1.msra.mxu0 %v718
    %968 = vmatprep.subr.mxu0 0.0
    %969 = vmatpush2.msra.mxu0 0.0
    %970 = vmatprep.subr.mxu0 0.0
    %971 = vmatpush2.msra.mxu0 0.0
    %972 = vmatprep.subr.mxu0 0.0
    %973 = vmatpush2.msra.mxu0 0.0
    %974 = vmatprep.subr.mxu0 0.0
    %975 = vmatpush2.msra.mxu0 0.0
    %976 = vmatprep.subr.mxu0 0.0
    %977 = vmatpush2.msra.mxu0 0.0
    %978 = vmatprep.subr.mxu0 0.0
    %979 = vmatpush2.msra.mxu0 0.0
    %980 = vmatprep.subr.mxu0 0.0
    %981 = vmatpush2.msra.mxu0 0.0
    %982 = vmatprep.subr.mxu0 0.0
    %983 = vmatpush2.msra.mxu0 0.0
    %984 = vmatprep.subr.mxu0 0.0
    %985 = vmatpush2.msra.mxu0 0.0
    %986 = vmatprep.subr.mxu0 0.0
    %987 = vmatpush2.msra.mxu0 0.0
    %988 = vmatprep.subr.mxu0 0.0
    %989 = vmatpush2.msra.mxu0 0.0
    %990 = vmatprep.subr.mxu0 0.0
    %991 = vmatpush2.msra.mxu0 0.0
    %992 = vmatprep.subr.mxu0 0.0
    %993 = vmatpush2.msra.mxu0 0.0
    %994 = vmatprep.subr.mxu0 0.0
    %995 = vmatpush2.msra.mxu0 0.0
    %996 = vmatprep.subr.mxu0 0.0
    %997 = vmatpush2.msra.mxu0 0.0
    %998 = vmatprep.subr.mxu0 0.0
    %999 = vmatpush2.msra.mxu0 0.0
    %1000 = vmatprep.mubr.f32.mxu0 0.0
    %1001 = vmatmul.mubr.f32.gmra.mxu0 %v934
    %v1002 = vpop.f32.mrf.mxu0
    %v1003 = vadd.f32 0.0, %v1002
    %v1004 = vpop.f32.mrf.mxu0
    %1005 = vdwg.mxu0
    %v1006 = vadd.f32 %v712, %v1003
    %v1007 = vxor.u32 %v1006, 2147483648
    %v1008 = vmul.f32 %v1007, 1.442695
    %v1009 = vpow.pop %v1008
    %v1010 = vadd.f32 %v1009, 1.0
    %v1011 = vrcp.pop %v1010
    %v1012 = vmul.f32 1.0, %v1011
    %v1013 = vtanh.pop %v1006
    %v1014 = vmul.f32 %v1012, %v922
    %1016 = vrot.lane.b32.xlu0 %v1013, 64
    %v1017 = vpop.permute.xlu0 %1016
    %v1019 = vmul.f32 %v1012, %v1017
    %1021 = vrot.lane.b32.xlu0 %v1019, 32
    %v1022 = vpop.permute.xlu0 %1021
    %v1024 = vadd.f32 %v1014, %v1022
    %v1025 = vtanh.pop %v1024
    %1027 = vrot.lane.b32.xlu0 %v1025, 64
    %v1028 = vpop.permute.xlu0 %1027
    %v1030 = vmul.f32 %v1012, %v1028
    %1032 = vrot.lane.b32.xlu0 %v1030, 32
    %v1033 = vpop.permute.xlu0 %1032
    %1035 = vst.msk [vmem:[#allocation4 + $0x10] sm:$0xff] %vm724, %v1033
    %v1036 = vsel %vm724, %v1033, 0
    %1038 = vmatprep.subr.mxu0 0.0
    %1039 = vmatpush1.msra.mxu0 0.0
    %1040 = vmatprep.subr.mxu0 0.0
    %1041 = vmatpush1.msra.mxu0 0.0
    %1042 = vmatprep.subr.mxu0 0.0
    %1043 = vmatpush1.msra.mxu0 0.0
    %1044 = vmatprep.subr.mxu0 0.0
    %1045 = vmatpush1.msra.mxu0 0.0
    %1046 = vmatprep.subr.mxu0 0.0
    %1047 = vmatpush1.msra.mxu0 0.0
    %1048 = vmatprep.subr.mxu0 0.0
    %1049 = vmatpush1.msra.mxu0 0.0
    %1050 = vmatprep.subr.mxu0 0.0
    %1051 = vmatpush1.msra.mxu0 0.0
    %1052 = vmatprep.subr.mxu0 0.0
    %1053 = vmatpush1.msra.mxu0 0.0
    %1054 = vmatprep.subr.mxu0 0.0
    %1055 = vmatpush1.msra.mxu0 0.0
    %1056 = vmatprep.subr.mxu0 0.0
    %1057 = vmatpush1.msra.mxu0 0.0
    %1058 = vmatprep.subr.mxu0 0.0
    %1059 = vmatpush1.msra.mxu0 0.0
    %1060 = vmatprep.subr.mxu0 0.0
    %1061 = vmatpush1.msra.mxu0 0.0
    %1062 = vmatprep.subr.mxu0 0.0
    %1063 = vmatpush1.msra.mxu0 %v721
    %1064 = vmatprep.subr.mxu0 0.0
    %1065 = vmatpush1.msra.mxu0 %v720
    %1066 = vmatprep.subr.mxu0 0.0
    %1067 = vmatpush1.msra.mxu0 %v719
    %1068 = vmatprep.subr.mxu0 0.0
    %1069 = vmatpush1.msra.mxu0 %v718
    %1070 = vmatprep.subr.mxu0 0.0
    %1071 = vmatpush2.msra.mxu0 0.0
    %1072 = vmatprep.subr.mxu0 0.0
    %1073 = vmatpush2.msra.mxu0 0.0
    %1074 = vmatprep.subr.mxu0 0.0
    %1075 = vmatpush2.msra.mxu0 0.0
    %1076 = vmatprep.subr.mxu0 0.0
    %1077 = vmatpush2.msra.mxu0 0.0
    %1078 = vmatprep.subr.mxu0 0.0
    %1079 = vmatpush2.msra.mxu0 0.0
    %1080 = vmatprep.subr.mxu0 0.0
    %1081 = vmatpush2.msra.mxu0 0.0
    %1082 = vmatprep.subr.mxu0 0.0
    %1083 = vmatpush2.msra.mxu0 0.0
    %1084 = vmatprep.subr.mxu0 0.0
    %1085 = vmatpush2.msra.mxu0 0.0
    %1086 = vmatprep.subr.mxu0 0.0
    %1087 = vmatpush2.msra.mxu0 0.0
    %1088 = vmatprep.subr.mxu0 0.0
    %1089 = vmatpush2.msra.mxu0 0.0
    %1090 = vmatprep.subr.mxu0 0.0
    %1091 = vmatpush2.msra.mxu0 0.0
    %1092 = vmatprep.subr.mxu0 0.0
    %1093 = vmatpush2.msra.mxu0 0.0
    %1094 = vmatprep.subr.mxu0 0.0
    %1095 = vmatpush2.msra.mxu0 0.0
    %1096 = vmatprep.subr.mxu0 0.0
    %1097 = vmatpush2.msra.mxu0 0.0
    %1098 = vmatprep.subr.mxu0 0.0
    %1099 = vmatpush2.msra.mxu0 0.0
    %1100 = vmatprep.subr.mxu0 0.0
    %1101 = vmatpush2.msra.mxu0 0.0
    %1102 = vmatprep.mubr.f32.mxu0 0.0
    %1103 = vmatmul.mubr.f32.gmra.mxu0 %v1036
    %v1104 = vpop.f32.mrf.mxu0
    %v1105 = vadd.f32 0.0, %v1104
    %v1106 = vpop.f32.mrf.mxu0
    %1107 = vdwg.mxu0
    %v1108 = vadd.f32 %v713, %v1105
    %v1109 = vxor.u32 %v1108, 2147483648
    %v1110 = vmul.f32 %v1109, 1.442695
    %v1111 = vpow.pop %v1110
    %v1112 = vadd.f32 %v1111, 1.0
    %v1113 = vrcp.pop %v1112
    %v1114 = vmul.f32 1.0, %v1113
    %v1115 = vtanh.pop %v1108
    %v1116 = vmul.f32 %v1114, %v1024
    %1118 = vrot.lane.b32.xlu0 %v1115, 64
    %v1119 = vpop.permute.xlu0 %1118
    %v1121 = vmul.f32 %v1114, %v1119
    %1123 = vrot.lane.b32.xlu0 %v1121, 32
    %v1124 = vpop.permute.xlu0 %1123
    %v1126 = vadd.f32 %v1116, %v1124
    %v1127 = vtanh.pop %v1126
    %1129 = vrot.lane.b32.xlu0 %v1127, 64
    %v1130 = vpop.permute.xlu0 %1129
    %v1132 = vmul.f32 %v1114, %v1130
    %1134 = vrot.lane.b32.xlu0 %v1132, 32
    %v1135 = vpop.permute.xlu0 %1134
    %1137 = vst.msk [vmem:[#allocation4 + $0x18] sm:$0xff] %vm724, %v1135
    %v1138 = vsel %vm724, %v1135, 0
    %1140 = vmatprep.subr.mxu0 0.0
    %1141 = vmatpush1.msra.mxu0 0.0
    %1142 = vmatprep.subr.mxu0 0.0
    %1143 = vmatpush1.msra.mxu0 0.0
    %1144 = vmatprep.subr.mxu0 0.0
    %1145 = vmatpush1.msra.mxu0 0.0
    %1146 = vmatprep.subr.mxu0 0.0
    %1147 = vmatpush1.msra.mxu0 0.0
    %1148 = vmatprep.subr.mxu0 0.0
    %1149 = vmatpush1.msra.mxu0 0.0
    %1150 = vmatprep.subr.mxu0 0.0
    %1151 = vmatpush1.msra.mxu0 0.0
    %1152 = vmatprep.subr.mxu0 0.0
    %1153 = vmatpush1.msra.mxu0 0.0
    %1154 = vmatprep.subr.mxu0 0.0
    %1155 = vmatpush1.msra.mxu0 0.0
    %1156 = vmatprep.subr.mxu0 0.0
    %1157 = vmatpush1.msra.mxu0 0.0
    %1158 = vmatprep.subr.mxu0 0.0
    %1159 = vmatpush1.msra.mxu0 0.0
    %1160 = vmatprep.subr.mxu0 0.0
    %1161 = vmatpush1.msra.mxu0 0.0
    %1162 = vmatprep.subr.mxu0 0.0
    %1163 = vmatpush1.msra.mxu0 0.0
    %1164 = vmatprep.subr.mxu0 0.0
    %1165 = vmatpush1.msra.mxu0 %v721
    %1166 = vmatprep.subr.mxu0 0.0
    %1167 = vmatpush1.msra.mxu0 %v720
    %1168 = vmatprep.subr.mxu0 0.0
    %1169 = vmatpush1.msra.mxu0 %v719
    %1170 = vmatprep.subr.mxu0 0.0
    %1171 = vmatpush1.msra.mxu0 %v718
    %1172 = vmatprep.subr.mxu0 0.0
    %1173 = vmatpush2.msra.mxu0 0.0
    %1174 = vmatprep.subr.mxu0 0.0
    %1175 = vmatpush2.msra.mxu0 0.0
    %1176 = vmatprep.subr.mxu0 0.0
    %1177 = vmatpush2.msra.mxu0 0.0
    %1178 = vmatprep.subr.mxu0 0.0
    %1179 = vmatpush2.msra.mxu0 0.0
    %1180 = vmatprep.subr.mxu0 0.0
    %1181 = vmatpush2.msra.mxu0 0.0
    %1182 = vmatprep.subr.mxu0 0.0
    %1183 = vmatpush2.msra.mxu0 0.0
    %1184 = vmatprep.subr.mxu0 0.0
    %1185 = vmatpush2.msra.mxu0 0.0
    %1186 = vmatprep.subr.mxu0 0.0
    %1187 = vmatpush2.msra.mxu0 0.0
    %1188 = vmatprep.subr.mxu0 0.0
    %1189 = vmatpush2.msra.mxu0 0.0
    %1190 = vmatprep.subr.mxu0 0.0
    %1191 = vmatpush2.msra.mxu0 0.0
    %1192 = vmatprep.subr.mxu0 0.0
    %1193 = vmatpush2.msra.mxu0 0.0
    %1194 = vmatprep.subr.mxu0 0.0
    %1195 = vmatpush2.msra.mxu0 0.0
    %1196 = vmatprep.subr.mxu0 0.0
    %1197 = vmatpush2.msra.mxu0 0.0
    %1198 = vmatprep.subr.mxu0 0.0
    %1199 = vmatpush2.msra.mxu0 0.0
    %1200 = vmatprep.subr.mxu0 0.0
    %1201 = vmatpush2.msra.mxu0 0.0
    %1202 = vmatprep.subr.mxu0 0.0
    %1203 = vmatpush2.msra.mxu0 0.0
    %1204 = vmatprep.mubr.f32.mxu0 0.0
    %1205 = vmatmul.mubr.f32.gmra.mxu0 %v1138
    %v1206 = vpop.f32.mrf.mxu0
    %v1207 = vadd.f32 0.0, %v1206
    %v1208 = vpop.f32.mrf.mxu0
    %1209 = vdwg.mxu0
    %v1210 = vadd.f32 %v714, %v1207
    %v1211 = vxor.u32 %v1210, 2147483648
    %v1212 = vmul.f32 %v1211, 1.442695
    %v1213 = vpow.pop %v1212
    %v1214 = vadd.f32 %v1213, 1.0
    %v1215 = vrcp.pop %v1214
    %v1216 = vmul.f32 1.0, %v1215
    %v1217 = vtanh.pop %v1210
    %v1218 = vmul.f32 %v1216, %v1126
    %1220 = vrot.lane.b32.xlu0 %v1217, 64
    %v1221 = vpop.permute.xlu0 %1220
    %v1223 = vmul.f32 %v1216, %v1221
    %1225 = vrot.lane.b32.xlu0 %v1223, 32
    %v1226 = vpop.permute.xlu0 %1225
    %v1228 = vadd.f32 %v1218, %v1226
    %v1229 = vtanh.pop %v1228
    %1231 = vrot.lane.b32.xlu0 %v1229, 64
    %v1232 = vpop.permute.xlu0 %1231
    %v1234 = vmul.f32 %v1216, %v1232
    %1236 = vrot.lane.b32.xlu0 %v1234, 32
    %v1237 = vpop.permute.xlu0 %1236
    %1239 = vst.msk [vmem:[#allocation4 + $0x20] sm:$0xff] %vm724, %v1237
    %v1240 = vsel %vm724, %v1237, 0
    %1242 = vmatprep.subr.mxu0 0.0
    %1243 = vmatpush1.msra.mxu0 0.0
    %1244 = vmatprep.subr.mxu0 0.0
    %1245 = vmatpush1.msra.mxu0 0.0
    %1246 = vmatprep.subr.mxu0 0.0
    %1247 = vmatpush1.msra.mxu0 0.0
    %1248 = vmatprep.subr.mxu0 0.0
    %1249 = vmatpush1.msra.mxu0 0.0
    %1250 = vmatprep.subr.mxu0 0.0
    %1251 = vmatpush1.msra.mxu0 0.0
    %1252 = vmatprep.subr.mxu0 0.0
    %1253 = vmatpush1.msra.mxu0 0.0
    %1254 = vmatprep.subr.mxu0 0.0
    %1255 = vmatpush1.msra.mxu0 0.0
    %1256 = vmatprep.subr.mxu0 0.0
    %1257 = vmatpush1.msra.mxu0 0.0
    %1258 = vmatprep.subr.mxu0 0.0
    %1259 = vmatpush1.msra.mxu0 0.0
    %1260 = vmatprep.subr.mxu0 0.0
    %1261 = vmatpush1.msra.mxu0 0.0
    %1262 = vmatprep.subr.mxu0 0.0
    %1263 = vmatpush1.msra.mxu0 0.0
    %1264 = vmatprep.subr.mxu0 0.0
    %1265 = vmatpush1.msra.mxu0 0.0
    %1266 = vmatprep.subr.mxu0 0.0
    %1267 = vmatpush1.msra.mxu0 %v721
    %1268 = vmatprep.subr.mxu0 0.0
    %1269 = vmatpush1.msra.mxu0 %v720
    %1270 = vmatprep.subr.mxu0 0.0
    %1271 = vmatpush1.msra.mxu0 %v719
    %1272 = vmatprep.subr.mxu0 0.0
    %1273 = vmatpush1.msra.mxu0 %v718
    %1274 = vmatprep.subr.mxu0 0.0
    %1275 = vmatpush2.msra.mxu0 0.0
    %1276 = vmatprep.subr.mxu0 0.0
    %1277 = vmatpush2.msra.mxu0 0.0
    %1278 = vmatprep.subr.mxu0 0.0
    %1279 = vmatpush2.msra.mxu0 0.0
    %1280 = vmatprep.subr.mxu0 0.0
    %1281 = vmatpush2.msra.mxu0 0.0
    %1282 = vmatprep.subr.mxu0 0.0
    %1283 = vmatpush2.msra.mxu0 0.0
    %1284 = vmatprep.subr.mxu0 0.0
    %1285 = vmatpush2.msra.mxu0 0.0
    %1286 = vmatprep.subr.mxu0 0.0
    %1287 = vmatpush2.msra.mxu0 0.0
    %1288 = vmatprep.subr.mxu0 0.0
    %1289 = vmatpush2.msra.mxu0 0.0
    %1290 = vmatprep.subr.mxu0 0.0
    %1291 = vmatpush2.msra.mxu0 0.0
    %1292 = vmatprep.subr.mxu0 0.0
    %1293 = vmatpush2.msra.mxu0 0.0
    %1294 = vmatprep.subr.mxu0 0.0
    %1295 = vmatpush2.msra.mxu0 0.0
    %1296 = vmatprep.subr.mxu0 0.0
    %1297 = vmatpush2.msra.mxu0 0.0
    %1298 = vmatprep.subr.mxu0 0.0
    %1299 = vmatpush2.msra.mxu0 0.0
    %1300 = vmatprep.subr.mxu0 0.0
    %1301 = vmatpush2.msra.mxu0 0.0
    %1302 = vmatprep.subr.mxu0 0.0
    %1303 = vmatpush2.msra.mxu0 0.0
    %1304 = vmatprep.subr.mxu0 0.0
    %1305 = vmatpush2.msra.mxu0 0.0
    %1306 = vmatprep.mubr.f32.mxu0 0.0
    %1307 = vmatmul.mubr.f32.gmra.mxu0 %v1240
    %v1308 = vpop.f32.mrf.mxu0
    %v1309 = vadd.f32 0.0, %v1308
    %v1310 = vpop.f32.mrf.mxu0
    %1311 = vdwg.mxu0
    %v1312 = vadd.f32 %v715, %v1309
    %v1313 = vxor.u32 %v1312, 2147483648
    %v1314 = vmul.f32 %v1313, 1.442695
    %v1315 = vpow.pop %v1314
    %v1316 = vadd.f32 %v1315, 1.0
    %v1317 = vrcp.pop %v1316
    %v1318 = vmul.f32 1.0, %v1317
    %v1319 = vtanh.pop %v1312
    %v1320 = vmul.f32 %v1318, %v1228
    %1322 = vrot.lane.b32.xlu0 %v1319, 64
    %v1323 = vpop.permute.xlu0 %1322
    %v1325 = vmul.f32 %v1318, %v1323
    %1327 = vrot.lane.b32.xlu0 %v1325, 32
    %v1328 = vpop.permute.xlu0 %1327
    %v1330 = vadd.f32 %v1320, %v1328
    %v1331 = vtanh.pop %v1330
    %1333 = vrot.lane.b32.xlu0 %v1331, 64
    %v1334 = vpop.permute.xlu0 %1333
    %v1336 = vmul.f32 %v1318, %v1334
    %1338 = vrot.lane.b32.xlu0 %v1336, 32
    %v1339 = vpop.permute.xlu0 %1338
    %1341 = vst.msk [vmem:[#allocation4 + $0x28] sm:$0xff] %vm724, %v1339
    %v1342 = vsel %vm724, %v1339, 0
    %1344 = vmatprep.subr.mxu0 0.0
    %1345 = vmatpush1.msra.mxu0 0.0
    %1346 = vmatprep.subr.mxu0 0.0
    %1347 = vmatpush1.msra.mxu0 0.0
    %1348 = vmatprep.subr.mxu0 0.0
    %1349 = vmatpush1.msra.mxu0 0.0
    %1350 = vmatprep.subr.mxu0 0.0
    %1351 = vmatpush1.msra.mxu0 0.0
    %1352 = vmatprep.subr.mxu0 0.0
    %1353 = vmatpush1.msra.mxu0 0.0
    %1354 = vmatprep.subr.mxu0 0.0
    %1355 = vmatpush1.msra.mxu0 0.0
    %1356 = vmatprep.subr.mxu0 0.0
    %1357 = vmatpush1.msra.mxu0 0.0
    %1358 = vmatprep.subr.mxu0 0.0
    %1359 = vmatpush1.msra.mxu0 0.0
    %1360 = vmatprep.subr.mxu0 0.0
    %1361 = vmatpush1.msra.mxu0 0.0
    %1362 = vmatprep.subr.mxu0 0.0
    %1363 = vmatpush1.msra.mxu0 0.0
    %1364 = vmatprep.subr.mxu0 0.0
    %1365 = vmatpush1.msra.mxu0 0.0
    %1366 = vmatprep.subr.mxu0 0.0
    %1367 = vmatpush1.msra.mxu0 0.0
    %1368 = vmatprep.subr.mxu0 0.0
    %1369 = vmatpush1.msra.mxu0 %v721
    %1370 = vmatprep.subr.mxu0 0.0
    %1371 = vmatpush1.msra.mxu0 %v720
    %1372 = vmatprep.subr.mxu0 0.0
    %1373 = vmatpush1.msra.mxu0 %v719
    %1374 = vmatprep.subr.mxu0 0.0
    %1375 = vmatpush1.msra.mxu0 %v718
    %1376 = vmatprep.subr.mxu0 0.0
    %1377 = vmatpush2.msra.mxu0 0.0
    %1378 = vmatprep.subr.mxu0 0.0
    %1379 = vmatpush2.msra.mxu0 0.0
    %1380 = vmatprep.subr.mxu0 0.0
    %1381 = vmatpush2.msra.mxu0 0.0
    %1382 = vmatprep.subr.mxu0 0.0
    %1383 = vmatpush2.msra.mxu0 0.0
    %1384 = vmatprep.subr.mxu0 0.0
    %1385 = vmatpush2.msra.mxu0 0.0
    %1386 = vmatprep.subr.mxu0 0.0
    %1387 = vmatpush2.msra.mxu0 0.0
    %1388 = vmatprep.subr.mxu0 0.0
    %1389 = vmatpush2.msra.mxu0 0.0
    %1390 = vmatprep.subr.mxu0 0.0
    %1391 = vmatpush2.msra.mxu0 0.0
    %1392 = vmatprep.subr.mxu0 0.0
    %1393 = vmatpush2.msra.mxu0 0.0
    %1394 = vmatprep.subr.mxu0 0.0
    %1395 = vmatpush2.msra.mxu0 0.0
    %1396 = vmatprep.subr.mxu0 0.0
    %1397 = vmatpush2.msra.mxu0 0.0
    %1398 = vmatprep.subr.mxu0 0.0
    %1399 = vmatpush2.msra.mxu0 0.0
    %1400 = vmatprep.subr.mxu0 0.0
    %1401 = vmatpush2.msra.mxu0 0.0
    %1402 = vmatprep.subr.mxu0 0.0
    %1403 = vmatpush2.msra.mxu0 0.0
    %1404 = vmatprep.subr.mxu0 0.0
    %1405 = vmatpush2.msra.mxu0 0.0
    %1406 = vmatprep.subr.mxu0 0.0
    %1407 = vmatpush2.msra.mxu0 0.0
    %1408 = vmatprep.mubr.f32.mxu0 0.0
    %1409 = vmatmul.mubr.f32.gmra.mxu0 %v1342
    %v1410 = vpop.f32.mrf.mxu0
    %v1411 = vadd.f32 0.0, %v1410
    %v1412 = vpop.f32.mrf.mxu0
    %1413 = vdwg.mxu0
    %v1414 = vadd.f32 %v716, %v1411
    %v1415 = vxor.u32 %v1414, 2147483648
    %v1416 = vmul.f32 %v1415, 1.442695
    %v1417 = vpow.pop %v1416
    %v1418 = vadd.f32 %v1417, 1.0
    %v1419 = vrcp.pop %v1418
    %v1420 = vmul.f32 1.0, %v1419
    %v1421 = vtanh.pop %v1414
    %v1422 = vmul.f32 %v1420, %v1330
    %1424 = vrot.lane.b32.xlu0 %v1421, 64
    %v1425 = vpop.permute.xlu0 %1424
    %v1427 = vmul.f32 %v1420, %v1425
    %1429 = vrot.lane.b32.xlu0 %v1427, 32
    %v1430 = vpop.permute.xlu0 %1429
    %v1432 = vadd.f32 %v1422, %v1430
    %v1433 = vtanh.pop %v1432
    %1435 = vrot.lane.b32.xlu0 %v1433, 64
    %v1436 = vpop.permute.xlu0 %1435
    %v1438 = vmul.f32 %v1420, %v1436
    %1440 = vrot.lane.b32.xlu0 %v1438, 32
    %v1441 = vpop.permute.xlu0 %1440
    %1443 = vst.msk [vmem:[#allocation4 + $0x30] sm:$0xff] %vm724, %v1441
    %v1444 = vsel %vm724, %v1441, 0
    %1446 = vmatprep.subr.mxu0 0.0
    %1447 = vmatpush1.msra.mxu0 0.0
    %1448 = vmatprep.subr.mxu0 0.0
    %1449 = vmatpush1.msra.mxu0 0.0
    %1450 = vmatprep.subr.mxu0 0.0
    %1451 = vmatpush1.msra.mxu0 0.0
    %1452 = vmatprep.subr.mxu0 0.0
    %1453 = vmatpush1.msra.mxu0 0.0
    %1454 = vmatprep.subr.mxu0 0.0
    %1455 = vmatpush1.msra.mxu0 0.0
    %1456 = vmatprep.subr.mxu0 0.0
    %1457 = vmatpush1.msra.mxu0 0.0
    %1458 = vmatprep.subr.mxu0 0.0
    %1459 = vmatpush1.msra.mxu0 0.0
    %1460 = vmatprep.subr.mxu0 0.0
    %1461 = vmatpush1.msra.mxu0 0.0
    %1462 = vmatprep.subr.mxu0 0.0
    %1463 = vmatpush1.msra.mxu0 0.0
    %1464 = vmatprep.subr.mxu0 0.0
    %1465 = vmatpush1.msra.mxu0 0.0
    %1466 = vmatprep.subr.mxu0 0.0
    %1467 = vmatpush1.msra.mxu0 0.0
    %1468 = vmatprep.subr.mxu0 0.0
    %1469 = vmatpush1.msra.mxu0 0.0
    %1470 = vmatprep.subr.mxu0 0.0
    %1471 = vmatpush1.msra.mxu0 %v721
    %1472 = vmatprep.subr.mxu0 0.0
    %1473 = vmatpush1.msra.mxu0 %v720
    %1474 = vmatprep.subr.mxu0 0.0
    %1475 = vmatpush1.msra.mxu0 %v719
    %1476 = vmatprep.subr.mxu0 0.0
    %1477 = vmatpush1.msra.mxu0 %v718
    %1478 = vmatprep.subr.mxu0 0.0
    %1479 = vmatpush2.msra.mxu0 0.0
    %1480 = vmatprep.subr.mxu0 0.0
    %1481 = vmatpush2.msra.mxu0 0.0
    %1482 = vmatprep.subr.mxu0 0.0
    %1483 = vmatpush2.msra.mxu0 0.0
    %1484 = vmatprep.subr.mxu0 0.0
    %1485 = vmatpush2.msra.mxu0 0.0
    %1486 = vmatprep.subr.mxu0 0.0
    %1487 = vmatpush2.msra.mxu0 0.0
    %1488 = vmatprep.subr.mxu0 0.0
    %1489 = vmatpush2.msra.mxu0 0.0
    %1490 = vmatprep.subr.mxu0 0.0
    %1491 = vmatpush2.msra.mxu0 0.0
    %1492 = vmatprep.subr.mxu0 0.0
    %1493 = vmatpush2.msra.mxu0 0.0
    %1494 = vmatprep.subr.mxu0 0.0
    %1495 = vmatpush2.msra.mxu0 0.0
    %1496 = vmatprep.subr.mxu0 0.0
    %1497 = vmatpush2.msra.mxu0 0.0
    %1498 = vmatprep.subr.mxu0 0.0
    %1499 = vmatpush2.msra.mxu0 0.0
    %1500 = vmatprep.subr.mxu0 0.0
    %1501 = vmatpush2.msra.mxu0 0.0
    %1502 = vmatprep.subr.mxu0 0.0
    %1503 = vmatpush2.msra.mxu0 0.0
    %1504 = vmatprep.subr.mxu0 0.0
    %1505 = vmatpush2.msra.mxu0 0.0
    %1506 = vmatprep.subr.mxu0 0.0
    %1507 = vmatpush2.msra.mxu0 0.0
    %1508 = vmatprep.subr.mxu0 0.0
    %1509 = vmatpush2.msra.mxu0 0.0
    %1510 = vmatprep.mubr.f32.mxu0 0.0
    %1511 = vmatmul.mubr.f32.gmra.mxu0 %v1444
    %v1512 = vpop.f32.mrf.mxu0
    %v1513 = vadd.f32 0.0, %v1512
    %v1514 = vpop.f32.mrf.mxu0
    %1515 = vdwg.mxu0
    %v1516 = vadd.f32 %v717, %v1513
    %v1517 = vxor.u32 %v1516, 2147483648
    %v1518 = vmul.f32 %v1517, 1.442695
    %v1519 = vpow.pop %v1518
    %v1520 = vadd.f32 %v1519, 1.0
    %v1521 = vrcp.pop %v1520
    %v1522 = vmul.f32 1.0, %v1521
    %v1523 = vtanh.pop %v1516
    %v1524 = vmul.f32 %v1522, %v1432
    %1526 = vrot.lane.b32.xlu0 %v1523, 64
    %v1527 = vpop.permute.xlu0 %1526
    %v1529 = vmul.f32 %v1522, %v1527
    %1531 = vrot.lane.b32.xlu0 %v1529, 32
    %v1532 = vpop.permute.xlu0 %1531
    %v1534 = vadd.f32 %v1524, %v1532
    %v1535 = vtanh.pop %v1534
    %1537 = vrot.lane.b32.xlu0 %v1535, 64
    %v1538 = vpop.permute.xlu0 %1537
    %v1540 = vmul.f32 %v1522, %v1538
    %1542 = vrot.lane.b32.xlu0 %v1540, 32
    %v1543 = vpop.permute.xlu0 %1542
    %1545 = vst.msk [vmem:[#allocation4 + $0x38] sm:$0xff] %vm724, %v1543
    %1546 = vst.msk [vmem:[#allocation2] sm:$0xff] %vm724, %v1543
    %1548 = vrot.lane.b32.xlu0 %v1534, 96
    %v1549 = vpop.permute.xlu0 %1548
    %1551 = vst.msk [vmem:[#allocation3] sm:$0xff] %vm724, %v1549
    %v1552 = vld [vmem:[#allocation4] sm:$0xff]
    %v1553 = vld [vmem:[#allocation4 + $0x8] sm:$0xff]
    %v1554 = vld [vmem:[#allocation4 + $0x10] sm:$0xff]
    %v1555 = vld [vmem:[#allocation4 + $0x18] sm:$0xff]
    %v1556 = vld [vmem:[#allocation4 + $0x20] sm:$0xff]
    %v1557 = vld [vmem:[#allocation4 + $0x28] sm:$0xff]
    %v1558 = vld [vmem:[#allocation4 + $0x30] sm:$0xff]
    %v1559 = vld [vmem:[#allocation4 + $0x38] sm:$0xff]
    %v1560 = vld [vmem:[%s3] sm:$0xff]
    %v1561 = vld [vmem:[%s3 + $0x8] sm:$0xff]
    %v1562 = vld [vmem:[%s3 + $0x10] sm:$0xff]
    %v1563 = vld [vmem:[%s3 + $0x18] sm:$0xff]
    %v1564 = vld [vmem:[%s4] sm:$0x1]
    %v1566 = vlaneseq
    %v1567 = vshrl.u32 %v1566, 7
    %v1568 = vsub.s32 0, %v1567
    %v1569 = vrot.slane %v1564, %v1568
    %v1572 = vsel %vm724, %v1552, 0
    %v1575 = vsel %vm724, %v1553, 0
    %v1578 = vsel %vm724, %v1554, 0
    %v1581 = vsel %vm724, %v1555, 0
    %v1584 = vsel %vm724, %v1556, 0
    %v1587 = vsel %vm724, %v1557, 0
    %v1590 = vsel %vm724, %v1558, 0
    %v1593 = vsel %vm724, %v1559, 0
    %1595 = vmatprep.subr.mxu0 0.0
    %1596 = vmatpush1.msra.mxu0 0.0
    %1597 = vmatprep.subr.mxu0 0.0
    %1598 = vmatpush1.msra.mxu0 0.0
    %1599 = vmatprep.subr.mxu0 0.0
    %1600 = vmatpush1.msra.mxu0 0.0
    %1601 = vmatprep.subr.mxu0 0.0
    %1602 = vmatpush1.msra.mxu0 0.0
    %1603 = vmatprep.subr.mxu0 0.0
    %1604 = vmatpush1.msra.mxu0 0.0
    %1605 = vmatprep.subr.mxu0 0.0
    %1606 = vmatpush1.msra.mxu0 0.0
    %1607 = vmatprep.subr.mxu0 0.0
    %1608 = vmatpush1.msra.mxu0 0.0
    %1609 = vmatprep.subr.mxu0 0.0
    %1610 = vmatpush1.msra.mxu0 0.0
    %1611 = vmatprep.subr.mxu0 0.0
    %1612 = vmatpush1.msra.mxu0 0.0
    %1613 = vmatprep.subr.mxu0 0.0
    %1614 = vmatpush1.msra.mxu0 0.0
    %1615 = vmatprep.subr.mxu0 0.0
    %1616 = vmatpush1.msra.mxu0 0.0
    %1617 = vmatprep.subr.mxu0 0.0
    %1618 = vmatpush1.msra.mxu0 0.0
    %1619 = vmatprep.subr.mxu0 0.0
    %1620 = vmatpush1.msra.mxu0 %v1563
    %1621 = vmatprep.subr.mxu0 0.0
    %1622 = vmatpush1.msra.mxu0 %v1562
    %1623 = vmatprep.subr.mxu0 0.0
    %1624 = vmatpush1.msra.mxu0 %v1561
    %1625 = vmatprep.subr.mxu0 0.0
    %1626 = vmatpush1.msra.mxu0 %v1560
    %1627 = vmatprep.subr.mxu0 0.0
    %1628 = vmatpush2.msra.mxu0 0.0
    %1629 = vmatprep.subr.mxu0 0.0
    %1630 = vmatpush2.msra.mxu0 0.0
    %1631 = vmatprep.subr.mxu0 0.0
    %1632 = vmatpush2.msra.mxu0 0.0
    %1633 = vmatprep.subr.mxu0 0.0
    %1634 = vmatpush2.msra.mxu0 0.0
    %1635 = vmatprep.subr.mxu0 0.0
    %1636 = vmatpush2.msra.mxu0 0.0
    %1637 = vmatprep.subr.mxu0 0.0
    %1638 = vmatpush2.msra.mxu0 0.0
    %1639 = vmatprep.subr.mxu0 0.0
    %1640 = vmatpush2.msra.mxu0 0.0
    %1641 = vmatprep.subr.mxu0 0.0
    %1642 = vmatpush2.msra.mxu0 0.0
    %1643 = vmatprep.subr.mxu0 0.0
    %1644 = vmatpush2.msra.mxu0 0.0
    %1645 = vmatprep.subr.mxu0 0.0
    %1646 = vmatpush2.msra.mxu0 0.0
    %1647 = vmatprep.subr.mxu0 0.0
    %1648 = vmatpush2.msra.mxu0 0.0
    %1649 = vmatprep.subr.mxu0 0.0
    %1650 = vmatpush2.msra.mxu0 0.0
    %1651 = vmatprep.subr.mxu0 0.0
    %1652 = vmatpush2.msra.mxu0 0.0
    %1653 = vmatprep.subr.mxu0 0.0
    %1654 = vmatpush2.msra.mxu0 0.0
    %1655 = vmatprep.subr.mxu0 0.0
    %1656 = vmatpush2.msra.mxu0 0.0
    %1657 = vmatprep.subr.mxu0 0.0
    %1658 = vmatpush2.msra.mxu0 0.0
    %1659 = vmatprep.mubr.f32.mxu0 0.0
    %1660 = vmatmul.mubr.f32.gmra.mxu0 %v1572
    %v1661 = vpop.f32.mrf.mxu0
    %v1662 = vadd.f32 %v1569, %v1661
    %v1663 = vpop.f32.mrf.mxu0
    %1664 = vmatprep.mubr.f32.mxu0 0.0
    %1665 = vmatmul.mubr.f32.gmra.mxu0 %v1575
    %v1666 = vpop.f32.mrf.mxu0
    %v1667 = vadd.f32 %v1569, %v1666
    %v1668 = vpop.f32.mrf.mxu0
    %1669 = vmatprep.mubr.f32.mxu0 0.0
    %1670 = vmatmul.mubr.f32.gmra.mxu0 %v1578
    %v1671 = vpop.f32.mrf.mxu0
    %v1672 = vadd.f32 %v1569, %v1671
    %v1673 = vpop.f32.mrf.mxu0
    %1674 = vmatprep.mubr.f32.mxu0 0.0
    %1675 = vmatmul.mubr.f32.gmra.mxu0 %v1581
    %v1676 = vpop.f32.mrf.mxu0
    %v1677 = vadd.f32 %v1569, %v1676
    %v1678 = vpop.f32.mrf.mxu0
    %1679 = vmatprep.mubr.f32.mxu0 0.0
    %1680 = vmatmul.mubr.f32.gmra.mxu0 %v1584
    %v1681 = vpop.f32.mrf.mxu0
    %v1682 = vadd.f32 %v1569, %v1681
    %v1683 = vpop.f32.mrf.mxu0
    %1684 = vmatprep.mubr.f32.mxu0 0.0
    %1685 = vmatmul.mubr.f32.gmra.mxu0 %v1587
    %v1686 = vpop.f32.mrf.mxu0
    %v1687 = vadd.f32 %v1569, %v1686
    %v1688 = vpop.f32.mrf.mxu0
    %1689 = vmatprep.mubr.f32.mxu0 0.0
    %1690 = vmatmul.mubr.f32.gmra.mxu0 %v1590
    %v1691 = vpop.f32.mrf.mxu0
    %v1692 = vadd.f32 %v1569, %v1691
    %v1693 = vpop.f32.mrf.mxu0
    %1694 = vmatprep.mubr.f32.mxu0 0.0
    %1695 = vmatmul.mubr.f32.gmra.mxu0 %v1593
    %v1696 = vpop.f32.mrf.mxu0
    %v1697 = vadd.f32 %v1569, %v1696
    %v1698 = vpop.f32.mrf.mxu0
    %1699 = vdwg.mxu0
    %1700 = vst [vmem:[%s6] sm:$0xff] %v1662
    %1701 = vst [vmem:[%s6 + $0x8] sm:$0xff] %v1667
    %1702 = vst [vmem:[%s6 + $0x10] sm:$0xff] %v1672
    %1703 = vst [vmem:[%s6 + $0x18] sm:$0xff] %v1677
    %1704 = vst [vmem:[%s6 + $0x20] sm:$0xff] %v1682
    %1705 = vst [vmem:[%s6 + $0x28] sm:$0xff] %v1687
    %1706 = vst [vmem:[%s6 + $0x30] sm:$0xff] %v1692
    %1707 = vst [vmem:[%s6 + $0x38] sm:$0xff] %v1697
    // Predicated region
    $region26: #{forward.1} parent=1 // pred_check
      _
    $region27: #{forward.1} parent=1 // pred_check_branch
      %1709 = sbr.rel (0) target = $region29
    $region28: #{forward.1} parent=1 // pred_region
      %s1711 = ssub.s32 1024, 1024
      %1712 = vsyncadd [#allocation5], %s1711
      %s1713 = sshll.u32 [#allocation4], 4
      %s1714 = int_to_ptr.vmem [resolvable:$true] %s1713
      %1719 = dma.vmem_to_hbm [thread:$0]  %s1714, 1024, %s5, [#allocation5], 128, 128, 8
    $region29: #{forward.1} parent=1 // pred_fallthru
      _
    // Predicated region
    $region30: #{forward.1} parent=1 // pred_check
      _
    $region31: #{forward.1} parent=1 // pred_check_branch
      %1721 = sbr.rel (0) target = $region33
    $region32: #{forward.1} parent=1 // pred_region
      _
    $region33: #{forward.1} parent=1 // pred_fallthru
      _
    // Predicated region
    $region34: #{forward.1} parent=1 // pred_check
      _
    $region35: #{forward.1} parent=1 // pred_check_branch
      %1723 = sbr.rel (0) target = $region37
    $region36: #{forward.1} parent=1 // pred_region
      %1724 = dma.done [#allocation5], 1024
    $region37: #{forward.1} parent=1 // pred_fallthru
      _
    // Predicated region
    $region38: #{forward.1} parent=1 // pred_check
      _
    $region39: #{forward.1} parent=1 // pred_check_branch
      %1726 = sbr.rel (0) target = $region41
    $region40: #{forward.1} parent=1 // pred_region
      _
    $region41: #{forward.1} parent=1 // pred_fallthru
      _
    %1727 = vsyncpa [#allocation5], 1

</llo_original>
